<compile_context>
chip_gen: v7x
topology: tpu7x:2x2x1
jax: 0.10.0
libtpu: 0.0.40
codegen_flags: <defaults>
</compile_context>

<pallas_src>
import functools

import jax
import jax.numpy as jnp
from jax import lax
from jax.experimental import pallas as pl
from jax.experimental.pallas import tpu as pltpu

_MIB = 1024 * 1024


def _pick_tile(n, preferred):
    """Largest 128/256-style tile <= preferred that divides n (full extent for tiny dims)."""
    if n <= preferred:
        return n
    for t in (512, 256, 128, 64, 32, 16, 8):
        if t <= preferred and n % t == 0:
            return t
    return n


def _vmem_limit(est_bytes):
    """Scoped-VMEM limit from tile arithmetic: 2x headroom, clamped to [16, 64] MiB."""
    return int(min(max(2 * est_bytes, 16 * _MIB), 64 * _MIB))


# ---------------------------------------------------------------------------
# Kernel 1: fused per-head QKV projection.  One (tl, E) x (E, 3*Dh) MXU matmul
# per (batch, L-block, head) grid point; writes q/k/v in (B, H, L, Dh) layout.
# ---------------------------------------------------------------------------
def _qkv_proj_kernel(x_ref, wqkv_ref, bqkv_ref, q_ref, k_ref, v_ref, *,
                     head_size, scale):
    x = x_ref[0]                  # (tl, E)   bf16
    w = wqkv_ref[0]               # (E, 3*Dh) bf16
    b = bqkv_ref[0]               # (1, 3*Dh) f32
    qkv = jnp.dot(x, w, preferred_element_type=jnp.float32) + b   # (tl, 3*Dh) f32
    d = head_size
    q_ref[0, 0] = (qkv[:, :d] * scale).astype(q_ref.dtype)        # scale hoisted onto q
    k_ref[0, 0] = qkv[:, d:2 * d].astype(k_ref.dtype)
    v_ref[0, 0] = qkv[:, 2 * d:].astype(v_ref.dtype)


# ---------------------------------------------------------------------------
# Kernel 2: flash attention with online softmax.  kv axis is the innermost
# ('arbitrary') grid axis; m/l/acc scratch persists across it.
# ---------------------------------------------------------------------------
def _flash_attn_kernel(q_ref, k_ref, v_ref, o_ref, m_sc, l_sc, acc_sc):
    ki = pl.program_id(3)

    @pl.when(ki == 0)
    def _():
        m_sc[...] = jnp.full(m_sc.shape, -jnp.inf, m_sc.dtype)
        l_sc[...] = jnp.zeros(l_sc.shape, l_sc.dtype)
        acc_sc[...] = jnp.zeros(acc_sc.shape, acc_sc.dtype)

    q = q_ref[0, 0]               # (tq, Dh)  bf16, already scaled by Dh**-0.5
    k = k_ref[0, 0]               # (tkv, Dh) bf16
    v = v_ref[0, 0]               # (tkv, Dh) bf16

    # q @ k^T contracting K's last dim: transposed-RHS MXU matmul, no explicit
    # k.T / XLU transpose.
    s = lax.dot_general(q, k, (((1,), (1,)), ((), ())),
                        preferred_element_type=jnp.float32)       # (tq, tkv) f32

    m_prev = m_sc[...]
    m_new = jnp.maximum(m_prev, jnp.max(s, axis=-1, keepdims=True))
    alpha = jnp.exp(m_prev - m_new)
    p = jnp.exp(s - m_new)                                         # (tq, tkv) f32
    l_sc[...] = alpha * l_sc[...] + jnp.sum(p, axis=-1, keepdims=True)
    acc_sc[...] = alpha * acc_sc[...] + jnp.dot(
        p.astype(jnp.bfloat16), v, preferred_element_type=jnp.float32)
    m_sc[...] = m_new

    @pl.when(ki == pl.num_programs(3) - 1)
    def _():
        # Post-PV normalization: tq*Dh multiplies (not tq*tkv), EUP reciprocal.
        inv = pl.reciprocal(l_sc[...], approx=True)
        o_ref[0, 0] = (acc_sc[...] * inv).astype(o_ref.dtype)


# ---------------------------------------------------------------------------
# Kernel 3: output projection over the scrambled (B, L, E) attention tensor.
# ---------------------------------------------------------------------------
def _out_proj_kernel(a_ref, wf_ref, bf_ref, o_ref):
    a = a_ref[0]                                                   # (tl, E) bf16
    out = jnp.dot(a, wf_ref[...], preferred_element_type=jnp.float32)
    o_ref[0] = (out + bf_ref[...]).astype(o_ref.dtype)


@functools.partial(jax.jit, static_argnames=("num_head", "out_dtype"))
def multi_head_attention(x, params, num_head, out_dtype=jnp.float32):
    """x: (B, L, E) f32; params: dict of pre-transposed (in, out) f32 weights/biases."""
    bs, L, E = x.shape
    h = num_head
    dh = E // h
    assert dh * h == E

    # ---- wrapper-side weight packing (bf16 MXU operands, f32 accumulation) ----
    def per_head_w(w):            # (E, E) -> (H, E, Dh): output columns grouped per head
        return w.reshape(E, h, dh).transpose(1, 0, 2)

    def per_head_b(b):            # (1, E) -> (H, 1, Dh)
        return b.reshape(1, h, dh).transpose(1, 0, 2)

    wqkv = jnp.concatenate(
        [per_head_w(params["wq"]), per_head_w(params["wk"]), per_head_w(params["wv"])],
        axis=2).astype(jnp.bfloat16)                               # (H, E, 3*Dh)
    bqkv = jnp.concatenate(
        [per_head_b(params["bq"]), per_head_b(params["bk"]), per_head_b(params["bv"])],
        axis=2).astype(jnp.float32)                                # (H, 1, 3*Dh)
    wf = params["wf"].astype(jnp.bfloat16)                         # (E, E)
    bf = params["bf"].astype(jnp.float32)                          # (1, E)
    x_bf16 = x.astype(jnp.bfloat16)

    # ---- tile sizes: 256-preferred (v6e/v7x); full extent for tiny toy dims ----
    # TODO(synk): per-generation tuning -- v5e is happy with 128-wide tiles.
    tl = _pick_tile(L, 256)
    tq = _pick_tile(L, 256)
    tkv = _pick_tile(L, 256)
    nl, nq, nkv = L // tl, L // tq, L // tkv
    f32b, bf16b = 4, 2

    # ------------------------------------------------------------------
    # 1) fused per-head QKV projection -> q, k, v : (B, H, L, Dh) bf16
    # ------------------------------------------------------------------
    proj_est = 2 * (tl * E * bf16b + E * 3 * dh * bf16b + 3 * dh * f32b
                    + 3 * tl * dh * bf16b)
    qkv_shape = jax.ShapeDtypeStruct((bs, h, L, dh), jnp.bfloat16)
    qkv_out_spec = pl.BlockSpec((1, 1, tl, dh), lambda b, li, hi: (b, hi, li, 0))
    q, k, v = pl.pallas_call(
        functools.partial(_qkv_proj_kernel, head_size=dh, scale=dh ** -0.5),
        out_shape=(qkv_shape, qkv_shape, qkv_shape),
        grid=(bs, nl, h),      # h innermost: x block DMA'd once per (b, L-block)
        in_specs=[
            pl.BlockSpec((1, tl, E), lambda b, li, hi: (b, li, 0)),       # x
            pl.BlockSpec((1, E, 3 * dh), lambda b, li, hi: (hi, 0, 0)),   # per-head W
            pl.BlockSpec((1, 1, 3 * dh), lambda b, li, hi: (hi, 0, 0)),   # per-head bias
        ],
        out_specs=(qkv_out_spec, qkv_out_spec, qkv_out_spec),
        compiler_params=pltpu.CompilerParams(
            dimension_semantics=("parallel", "parallel", "parallel"),
            vmem_limit_bytes=_vmem_limit(proj_est)),
    )(x_bf16, wqkv, bqkv)

    # ------------------------------------------------------------------
    # 2) flash attention: grid (B, H, q-blocks, kv-blocks), online softmax
    # ------------------------------------------------------------------
    flash_est = (2 * (tq * dh * bf16b + 2 * tkv * dh * bf16b + tq * dh * bf16b)
                 + 2 * tq * f32b + tq * dh * f32b)
    atten = pl.pallas_call(
        _flash_attn_kernel,
        out_shape=jax.ShapeDtypeStruct((bs, h, L, dh), jnp.bfloat16),
        grid=(bs, h, nq, nkv),
        in_specs=[
            pl.BlockSpec((1, 1, tq, dh), lambda b, hi, qi, ki: (b, hi, qi, 0)),   # q
            pl.BlockSpec((1, 1, tkv, dh), lambda b, hi, qi, ki: (b, hi, ki, 0)),  # k
            pl.BlockSpec((1, 1, tkv, dh), lambda b, hi, qi, ki: (b, hi, ki, 0)),  # v
        ],
        out_specs=pl.BlockSpec((1, 1, tq, dh), lambda b, hi, qi, ki: (b, hi, qi, 0)),
        scratch_shapes=[
            pltpu.VMEM((tq, 1), jnp.float32),    # running max
            pltpu.VMEM((tq, 1), jnp.float32),    # running softmax denominator
            pltpu.VMEM((tq, dh), jnp.float32),   # running PV accumulator
        ],
        compiler_params=pltpu.CompilerParams(
            dimension_semantics=("parallel", "parallel", "parallel", "arbitrary"),
            vmem_limit_bytes=_vmem_limit(flash_est)),
    )(q, k, v)

    # PyTorch quirk reproduced exactly: (B, H, L, Dh) -> (B, L, E) row-major
    # reshape WITHOUT un-permuting the head axis.  Free reinterpretation.
    atten = atten.reshape(bs, L, E)

    # ------------------------------------------------------------------
    # 3) output projection (final output f32 by default; pass bf16 downstream
    #    to halve HBM writeback if the consumer allows).
    # ------------------------------------------------------------------
    outp_est = (2 * (tl * E * bf16b + tl * E * f32b)
                + E * E * bf16b + E * f32b)
    seq_spec = pl.BlockSpec((1, tl, E), lambda b, li: (b, li, 0))
    out = pl.pallas_call(
        _out_proj_kernel,
        out_shape=jax.ShapeDtypeStruct((bs, L, E), out_dtype),
        grid=(bs, nl),
        in_specs=[
            seq_spec,                                      # scrambled attention
            pl.BlockSpec((E, E), lambda b, li: (0, 0)),    # wf
            pl.BlockSpec((1, E), lambda b, li: (0, 0)),    # bf
        ],
        out_specs=seq_spec,
        compiler_params=pltpu.CompilerParams(
            dimension_semantics=("parallel", "parallel"),
            vmem_limit_bytes=_vmem_limit(outp_est)),
    )(atten, wf, bf)
    return out


def _reference(x, params, num_head):
    """Pure-JAX f32 replica of the PyTorch forward (including reshape quirk)."""
    bs, L, E = x.shape
    dh = E // num_head
    q = x @ params["wq"] + params["bq"][0]
    k = x @ params["wk"] + params["bk"][0]
    v = x @ params["wv"] + params["bv"][0]
    q = q.reshape(bs, L, num_head, dh).transpose(0, 2, 1, 3)
    k = k.reshape(bs, L, num_head, dh).transpose(0, 2, 1, 3)
    v = v.reshape(bs, L, num_head, dh).transpose(0, 2, 1, 3)
    s = jnp.einsum("bhqd,bhkd->bhqk", q, k) * dh ** (-0.5)
    p = jax.nn.softmax(s, axis=-1)
    atten = jnp.einsum("bhqk,bhkd->bhqd", p, v)
    atten = atten.reshape(bs, L, E)            # same scrambled reshape as PyTorch
    return atten @ params["wf"] + params["bf"][0]


if __name__ == "__main__":
    # Small shapes consistent with the module: B=2, L=8, E=32, H=4, Dh=8.
    B, L, E, H = 2, 8, 32, 4

    key = jax.random.PRNGKey(0)
    keys = jax.random.split(key, 9)

    def lin_init(kw, kb, fan_in, fan_out):
        # Deterministic init; stored as (in, out) = PyTorch weight transposed.
        bound = 1.0 / (fan_in ** 0.5)
        w = jax.random.uniform(kw, (fan_in, fan_out), jnp.float32, -bound, bound)
        b = jax.random.uniform(kb, (1, fan_out), jnp.float32, -bound, bound)
        return w, b

    wq, bq = lin_init(keys[0], keys[1], E, E)
    wk, bk = lin_init(keys[2], keys[3], E, E)
    wv, bv = lin_init(keys[4], keys[5], E, E)
    wf, bf = lin_init(keys[6], keys[7], E, E)
    params = dict(wq=wq, bq=bq, wk=wk, bk=bk, wv=wv, bv=bv, wf=wf, bf=bf)

    x = jax.random.normal(keys[8], (B, L, E), jnp.float32)

    out = multi_head_attention(x, params, num_head=H)
    out = jax.block_until_ready(out)

    ref = _reference(x, params, num_head=H)
    assert out.shape == (B, L, E)
    # bf16 MXU operands / bf16 intermediates with f32 accumulation and an
    # approx-reciprocal softmax denominator -> relaxed tolerance vs f32 ref.
    assert jnp.allclose(out, ref, atol=3e-2, rtol=3e-2), "mismatch vs reference"

    print("KERNEL_OK")
</pallas_src>

<mosaic_0001>
module attributes {stable_mosaic.version = 11 : i64} {
  func.func @_qkv_proj_kernel(%arg0: i32, %arg1: i32, %arg2: i32, %arg3: memref<1x8x32xbf16, #tpu.memory_space<vmem>>, %arg4: memref<1x32x24xbf16, #tpu.memory_space<vmem>>, %arg5: memref<1x1x24xf32, #tpu.memory_space<vmem>>, %arg6: memref<1x1x8x8xbf16, #tpu.memory_space<vmem>>, %arg7: memref<1x1x8x8xbf16, #tpu.memory_space<vmem>>, %arg8: memref<1x1x8x8xbf16, #tpu.memory_space<vmem>>) attributes {dimension_semantics = [#tpu.dimension_semantics<parallel>, #tpu.dimension_semantics<parallel>, #tpu.dimension_semantics<parallel>], iteration_bounds = array<i64: 2, 1, 4>, scalar_prefetch = 0 : i64, scratch_operands = 0 : i64, tpu.core_type = #tpu.core_type<tc>, window_params = [{transform_indices = @transform_0, window_bounds = array<i64: 1, 8, 32>}, {transform_indices = @transform_1, window_bounds = array<i64: 1, 32, 24>}, {transform_indices = @transform_2, window_bounds = array<i64: 1, 1, 24>}, {transform_indices = @transform_3, window_bounds = array<i64: 1, 1, 8, 8>}, {transform_indices = @transform_4, window_bounds = array<i64: 1, 1, 8, 8>}, {transform_indices = @transform_5, window_bounds = array<i64: 1, 1, 8, 8>}]} {
    %c0 = arith.constant 0 : index
    %c0_0 = arith.constant 0 : index
    %c0_1 = arith.constant 0 : index
    %0 = vector.load %arg3[%c0, %c0_0, %c0_1] : memref<1x8x32xbf16, #tpu.memory_space<vmem>>, vector<1x8x32xbf16>
    %1 = vector.shape_cast %0 : vector<1x8x32xbf16> to vector<8x32xbf16>
    %c0_2 = arith.constant 0 : index
    %c0_3 = arith.constant 0 : index
    %c0_4 = arith.constant 0 : index
    %2 = vector.load %arg4[%c0_2, %c0_3, %c0_4] : memref<1x32x24xbf16, #tpu.memory_space<vmem>>, vector<1x32x24xbf16>
    %3 = vector.shape_cast %2 : vector<1x32x24xbf16> to vector<32x24xbf16>
    %c0_5 = arith.constant 0 : index
    %c0_6 = arith.constant 0 : index
    %c0_7 = arith.constant 0 : index
    %4 = vector.load %arg5[%c0_5, %c0_6, %c0_7] : memref<1x1x24xf32, #tpu.memory_space<vmem>>, vector<1x1x24xf32>
    %5 = vector.shape_cast %4 : vector<1x1x24xf32> to vector<1x24xf32>
    %cst = arith.constant dense<0.000000e+00> : vector<8x24xf32>
    %6 = tpu.matmul %1, %3, %cst {dimension_numbers = #tpu.dot_dimension_numbers<[1], [0], [0], [1], [0, 0, 1, 1], [], []>} : vector<8x32xbf16>, vector<32x24xbf16>, vector<8x24xf32> -> vector<8x24xf32>
    %7 = vector.broadcast %5 : vector<1x24xf32> to vector<8x24xf32>
    %8 = arith.addf %6, %7 : vector<8x24xf32>
    %9 = vector.extract_strided_slice %8 {offsets = [0, 0], sizes = [8, 8], strides = [1, 1]} : vector<8x24xf32> to vector<8x8xf32>
    %cst_8 = arith.constant 0.353553385 : f32
    %10 = vector.broadcast %cst_8 : f32 to vector<8x8xf32>
    %11 = arith.mulf %9, %10 : vector<8x8xf32>
    %12 = arith.truncf %11 : vector<8x8xf32> to vector<8x8xbf16>
    %c0_9 = arith.constant 0 : index
    %c0_10 = arith.constant 0 : index
    %c0_11 = arith.constant 0 : index
    %c0_12 = arith.constant 0 : index
    %13 = vector.load %arg6[%c0_9, %c0_10, %c0_11, %c0_12] : memref<1x1x8x8xbf16, #tpu.memory_space<vmem>>, vector<1x1x8x8xbf16>
    %14 = vector.shape_cast %13 : vector<1x1x8x8xbf16> to vector<8x8xbf16>
    %15 = vector.shape_cast %12 : vector<8x8xbf16> to vector<1x1x8x8xbf16>
    tpu.vector_store %arg6[%c0_9, %c0_10, %c0_11, %c0_12], %15 {strides = array<i32>} : memref<1x1x8x8xbf16, #tpu.memory_space<vmem>>, vector<1x1x8x8xbf16>,
    %16 = vector.extract_strided_slice %8 {offsets = [0, 8], sizes = [8, 8], strides = [1, 1]} : vector<8x24xf32> to vector<8x8xf32>
    %17 = arith.truncf %16 : vector<8x8xf32> to vector<8x8xbf16>
    %c0_13 = arith.constant 0 : index
    %c0_14 = arith.constant 0 : index
    %c0_15 = arith.constant 0 : index
    %c0_16 = arith.constant 0 : index
    %18 = vector.load %arg7[%c0_13, %c0_14, %c0_15, %c0_16] : memref<1x1x8x8xbf16, #tpu.memory_space<vmem>>, vector<1x1x8x8xbf16>
    %19 = vector.shape_cast %18 : vector<1x1x8x8xbf16> to vector<8x8xbf16>
    %20 = vector.shape_cast %17 : vector<8x8xbf16> to vector<1x1x8x8xbf16>
    tpu.vector_store %arg7[%c0_13, %c0_14, %c0_15, %c0_16], %20 {strides = array<i32>} : memref<1x1x8x8xbf16, #tpu.memory_space<vmem>>, vector<1x1x8x8xbf16>,
    %21 = vector.extract_strided_slice %8 {offsets = [0, 16], sizes = [8, 8], strides = [1, 1]} : vector<8x24xf32> to vector<8x8xf32>
    %22 = arith.truncf %21 : vector<8x8xf32> to vector<8x8xbf16>
    %c0_17 = arith.constant 0 : index
    %c0_18 = arith.constant 0 : index
    %c0_19 = arith.constant 0 : index
    %c0_20 = arith.constant 0 : index
    %23 = vector.load %arg8[%c0_17, %c0_18, %c0_19, %c0_20] : memref<1x1x8x8xbf16, #tpu.memory_space<vmem>>, vector<1x1x8x8xbf16>
    %24 = vector.shape_cast %23 : vector<1x1x8x8xbf16> to vector<8x8xbf16>
    %25 = vector.shape_cast %22 : vector<8x8xbf16> to vector<1x1x8x8xbf16>
    tpu.vector_store %arg8[%c0_17, %c0_18, %c0_19, %c0_20], %25 {strides = array<i32>} : memref<1x1x8x8xbf16, #tpu.memory_space<vmem>>, vector<1x1x8x8xbf16>,
    return
  }
  func.func @transform_0(%arg0: i32, %arg1: i32, %arg2: i32) -> (i32, i32, i32) {
    %c0_i32 = arith.constant 0 : i32
    %c0_i32_0 = arith.constant 0 : i32
    return %arg0, %arg1, %c0_i32 : i32, i32, i32
  }
  func.func @transform_1(%arg0: i32, %arg1: i32, %arg2: i32) -> (i32, i32, i32) {
    %c0_i32 = arith.constant 0 : i32
    %c0_i32_0 = arith.constant 0 : i32
    %c0_i32_1 = arith.constant 0 : i32
    return %arg2, %c0_i32, %c0_i32_0 : i32, i32, i32
  }
  func.func @transform_2(%arg0: i32, %arg1: i32, %arg2: i32) -> (i32, i32, i32) {
    %c0_i32 = arith.constant 0 : i32
    %c0_i32_0 = arith.constant 0 : i32
    %c0_i32_1 = arith.constant 0 : i32
    return %arg2, %c0_i32, %c0_i32_0 : i32, i32, i32
  }
  func.func @transform_3(%arg0: i32, %arg1: i32, %arg2: i32) -> (i32, i32, i32, i32) {
    %c0_i32 = arith.constant 0 : i32
    %c0_i32_0 = arith.constant 0 : i32
    return %arg0, %arg2, %arg1, %c0_i32 : i32, i32, i32, i32
  }
  func.func @transform_4(%arg0: i32, %arg1: i32, %arg2: i32) -> (i32, i32, i32, i32) {
    %c0_i32 = arith.constant 0 : i32
    %c0_i32_0 = arith.constant 0 : i32
    return %arg0, %arg2, %arg1, %c0_i32 : i32, i32, i32, i32
  }
  func.func @transform_5(%arg0: i32, %arg1: i32, %arg2: i32) -> (i32, i32, i32, i32) {
    %c0_i32 = arith.constant 0 : i32
    %c0_i32_0 = arith.constant 0 : i32
    return %arg0, %arg2, %arg1, %c0_i32 : i32, i32, i32, i32
  }
}

module attributes {stable_mosaic.version = 11 : i64} {
  func.func @_flash_attn_kernel(%arg0: i32, %arg1: i32, %arg2: i32, %arg3: i32, %arg4: memref<1x1x8x8xbf16, #tpu.memory_space<vmem>>, %arg5: memref<1x1x8x8xbf16, #tpu.memory_space<vmem>>, %arg6: memref<1x1x8x8xbf16, #tpu.memory_space<vmem>>, %arg7: memref<1x1x8x8xbf16, #tpu.memory_space<vmem>>, %arg8: memref<8x1xf32, #tpu.memory_space<vmem>>, %arg9: memref<8x1xf32, #tpu.memory_space<vmem>>, %arg10: memref<8x8xf32, #tpu.memory_space<vmem>>) attributes {dimension_semantics = [#tpu.dimension_semantics<parallel>, #tpu.dimension_semantics<parallel>, #tpu.dimension_semantics<parallel>, #tpu.dimension_semantics<arbitrary>], iteration_bounds = array<i64: 2, 4, 1, 1>, scalar_prefetch = 0 : i64, scratch_operands = 3 : i64, tpu.core_type = #tpu.core_type<tc>, window_params = [{transform_indices = @transform_0, window_bounds = array<i64: 1, 1, 8, 8>}, {transform_indices = @transform_1, window_bounds = array<i64: 1, 1, 8, 8>}, {transform_indices = @transform_2, window_bounds = array<i64: 1, 1, 8, 8>}, {transform_indices = @transform_3, window_bounds = array<i64: 1, 1, 8, 8>}]} {
    %c0_i32 = arith.constant 0 : i32
    %0 = arith.cmpi eq, %arg3, %c0_i32 : i32
    %1 = arith.extui %0 : i1 to i32
    %c0_i32_0 = arith.constant 0 : i32
    %2 = arith.cmpi ne, %1, %c0_i32_0 : i32
    scf.if %2 {
      %cst_29 = arith.constant 0xFF800000 : f32
      %36 = vector.broadcast %cst_29 : f32 to vector<8x1xf32>
      %c0_30 = arith.constant 0 : index
      %c0_31 = arith.constant 0 : index
      %37 = vector.load %arg8[%c0_30, %c0_31] : memref<8x1xf32, #tpu.memory_space<vmem>>, vector<8x1xf32>
      tpu.vector_store %arg8[%c0_30, %c0_31], %36 {strides = array<i32>} : memref<8x1xf32, #tpu.memory_space<vmem>>, vector<8x1xf32>,
      %cst_32 = arith.constant 0.000000e+00 : f32
      %38 = vector.broadcast %cst_32 : f32 to vector<8x1xf32>
      %c0_33 = arith.constant 0 : index
      %c0_34 = arith.constant 0 : index
      %39 = vector.load %arg9[%c0_33, %c0_34] : memref<8x1xf32, #tpu.memory_space<vmem>>, vector<8x1xf32>
      tpu.vector_store %arg9[%c0_33, %c0_34], %38 {strides = array<i32>} : memref<8x1xf32, #tpu.memory_space<vmem>>, vector<8x1xf32>,
      %cst_35 = arith.constant 0.000000e+00 : f32
      %40 = vector.broadcast %cst_35 : f32 to vector<8x8xf32>
      %c0_36 = arith.constant 0 : index
      %c0_37 = arith.constant 0 : index
      %41 = vector.load %arg10[%c0_36, %c0_37] : memref<8x8xf32, #tpu.memory_space<vmem>>, vector<8x8xf32>
      tpu.vector_store %arg10[%c0_36, %c0_37], %40 {strides = array<i32>} : memref<8x8xf32, #tpu.memory_space<vmem>>, vector<8x8xf32>,
    } else {
    }
    %c0 = arith.constant 0 : index
    %c0_1 = arith.constant 0 : index
    %c0_2 = arith.constant 0 : index
    %c0_3 = arith.constant 0 : index
    %3 = vector.load %arg4[%c0, %c0_1, %c0_2, %c0_3] : memref<1x1x8x8xbf16, #tpu.memory_space<vmem>>, vector<1x1x8x8xbf16>
    %4 = vector.shape_cast %3 : vector<1x1x8x8xbf16> to vector<8x8xbf16>
    %c0_4 = arith.constant 0 : index
    %c0_5 = arith.constant 0 : index
    %c0_6 = arith.constant 0 : index
    %c0_7 = arith.constant 0 : index
    %5 = vector.load %arg5[%c0_4, %c0_5, %c0_6, %c0_7] : memref<1x1x8x8xbf16, #tpu.memory_space<vmem>>, vector<1x1x8x8xbf16>
    %6 = vector.shape_cast %5 : vector<1x1x8x8xbf16> to vector<8x8xbf16>
    %c0_8 = arith.constant 0 : index
    %c0_9 = arith.constant 0 : index
    %c0_10 = arith.constant 0 : index
    %c0_11 = arith.constant 0 : index
    %7 = vector.load %arg6[%c0_8, %c0_9, %c0_10, %c0_11] : memref<1x1x8x8xbf16, #tpu.memory_space<vmem>>, vector<1x1x8x8xbf16>
    %8 = vector.shape_cast %7 : vector<1x1x8x8xbf16> to vector<8x8xbf16>
    %cst = arith.constant dense<0.000000e+00> : vector<8x8xf32>
    %9 = tpu.matmul %4, %6, %cst {dimension_numbers = #tpu.dot_dimension_numbers<[1], [1], [0], [0], [0, 0, 1, 0], [], []>} : vector<8x8xbf16>, vector<8x8xbf16>, vector<8x8xf32> -> vector<8x8xf32>
    %c0_12 = arith.constant 0 : index
    %c0_13 = arith.constant 0 : index
    %10 = vector.load %arg8[%c0_12, %c0_13] : memref<8x1xf32, #tpu.memory_space<vmem>>, vector<8x1xf32>
    %cst_14 = arith.constant dense<0xFF800000> : vector<8xf32>
    %11 = vector.multi_reduction <maximumf>, %9, %cst_14 [1] : vector<8x8xf32> to vector<8xf32>
    %12 = vector.shape_cast %11 : vector<8xf32> to vector<8x1xf32>
    %13 = arith.maximumf %10, %12 : vector<8x1xf32>
    %14 = arith.subf %10, %13 : vector<8x1xf32>
    %15 = math.exp %14 : vector<8x1xf32>
    %16 = vector.broadcast %13 : vector<8x1xf32> to vector<8x8xf32>
    %17 = arith.subf %9, %16 : vector<8x8xf32>
    %18 = math.exp %17 : vector<8x8xf32>
    %c0_15 = arith.constant 0 : index
    %c0_16 = arith.constant 0 : index
    %19 = vector.load %arg9[%c0_15, %c0_16] : memref<8x1xf32, #tpu.memory_space<vmem>>, vector<8x1xf32>
    %20 = arith.mulf %15, %19 : vector<8x1xf32>
    %cst_17 = arith.constant dense<0.000000e+00> : vector<8xf32>
    %21 = vector.multi_reduction <add>, %18, %cst_17 [1] : vector<8x8xf32> to vector<8xf32>
    %22 = vector.shape_cast %21 : vector<8xf32> to vector<8x1xf32>
    %23 = arith.addf %20, %22 : vector<8x1xf32>
    %c0_18 = arith.constant 0 : index
    %c0_19 = arith.constant 0 : index
    %24 = vector.load %arg9[%c0_18, %c0_19] : memref<8x1xf32, #tpu.memory_space<vmem>>, vector<8x1xf32>
    tpu.vector_store %arg9[%c0_18, %c0_19], %23 {strides = array<i32>} : memref<8x1xf32, #tpu.memory_space<vmem>>, vector<8x1xf32>,
    %c0_20 = arith.constant 0 : index
    %c0_21 = arith.constant 0 : index
    %25 = vector.load %arg10[%c0_20, %c0_21] : memref<8x8xf32, #tpu.memory_space<vmem>>, vector<8x8xf32>
    %26 = vector.broadcast %15 : vector<8x1xf32> to vector<8x8xf32>
    %27 = arith.mulf %26, %25 : vector<8x8xf32>
    %28 = arith.truncf %18 : vector<8x8xf32> to vector<8x8xbf16>
    %cst_22 = arith.constant dense<0.000000e+00> : vector<8x8xf32>
    %29 = tpu.matmul %28, %8, %cst_22 {dimension_numbers = #tpu.dot_dimension_numbers<[1], [0], [0], [1], [0, 0, 1, 1], [], []>} : vector<8x8xbf16>, vector<8x8xbf16>, vector<8x8xf32> -> vector<8x8xf32>
    %30 = arith.addf %27, %29 : vector<8x8xf32>
    %c0_23 = arith.constant 0 : index
    %c0_24 = arith.constant 0 : index
    %31 = vector.load %arg10[%c0_23, %c0_24] : memref<8x8xf32, #tpu.memory_space<vmem>>, vector<8x8xf32>
    tpu.vector_store %arg10[%c0_23, %c0_24], %30 {strides = array<i32>} : memref<8x8xf32, #tpu.memory_space<vmem>>, vector<8x8xf32>,
    %c0_25 = arith.constant 0 : index
    %c0_26 = arith.constant 0 : index
    %32 = vector.load %arg8[%c0_25, %c0_26] : memref<8x1xf32, #tpu.memory_space<vmem>>, vector<8x1xf32>
    tpu.vector_store %arg8[%c0_25, %c0_26], %13 {strides = array<i32>} : memref<8x1xf32, #tpu.memory_space<vmem>>, vector<8x1xf32>,
    %c0_i32_27 = arith.constant 0 : i32
    %33 = arith.cmpi eq, %arg3, %c0_i32_27 : i32
    %34 = arith.extui %33 : i1 to i32
    %c0_i32_28 = arith.constant 0 : i32
    %35 = arith.cmpi ne, %34, %c0_i32_28 : i32
    scf.if %35 {
      %c0_29 = arith.constant 0 : index
      %c0_30 = arith.constant 0 : index
      %36 = vector.load %arg9[%c0_29, %c0_30] : memref<8x1xf32, #tpu.memory_space<vmem>>, vector<8x1xf32>
      %37 = tpu.reciprocal %36 {approx = true} : vector<8x1xf32> -> vector<8x1xf32>
      %c0_31 = arith.constant 0 : index
      %c0_32 = arith.constant 0 : index
      %38 = vector.load %arg10[%c0_31, %c0_32] : memref<8x8xf32, #tpu.memory_space<vmem>>, vector<8x8xf32>
      %39 = vector.broadcast %37 : vector<8x1xf32> to vector<8x8xf32>
      %40 = arith.mulf %38, %39 : vector<8x8xf32>
      %41 = arith.truncf %40 : vector<8x8xf32> to vector<8x8xbf16>
      %c0_33 = arith.constant 0 : index
      %c0_34 = arith.constant 0 : index
      %c0_35 = arith.constant 0 : index
      %c0_36 = arith.constant 0 : index
      %42 = vector.load %arg7[%c0_33, %c0_34, %c0_35, %c0_36] : memref<1x1x8x8xbf16, #tpu.memory_space<vmem>>, vector<1x1x8x8xbf16>
      %43 = vector.shape_cast %42 : vector<1x1x8x8xbf16> to vector<8x8xbf16>
      %44 = vector.shape_cast %41 : vector<8x8xbf16> to vector<1x1x8x8xbf16>
      tpu.vector_store %arg7[%c0_33, %c0_34, %c0_35, %c0_36], %44 {strides = array<i32>} : memref<1x1x8x8xbf16, #tpu.memory_space<vmem>>, vector<1x1x8x8xbf16>,
    } else {
    }
    return
  }
  func.func @transform_0(%arg0: i32, %arg1: i32, %arg2: i32, %arg3: i32) -> (i32, i32, i32, i32) {
    %c0_i32 = arith.constant 0 : i32
    %c0_i32_0 = arith.constant 0 : i32
    return %arg0, %arg1, %arg2, %c0_i32 : i32, i32, i32, i32
  }
  func.func @transform_1(%arg0: i32, %arg1: i32, %arg2: i32, %arg3: i32) -> (i32, i32, i32, i32) {
    %c0_i32 = arith.constant 0 : i32
    %c0_i32_0 = arith.constant 0 : i32
    return %arg0, %arg1, %arg3, %c0_i32 : i32, i32, i32, i32
  }
  func.func @transform_2(%arg0: i32, %arg1: i32, %arg2: i32, %arg3: i32) -> (i32, i32, i32, i32) {
    %c0_i32 = arith.constant 0 : i32
    %c0_i32_0 = arith.constant 0 : i32
    return %arg0, %arg1, %arg3, %c0_i32 : i32, i32, i32, i32
  }
  func.func @transform_3(%arg0: i32, %arg1: i32, %arg2: i32, %arg3: i32) -> (i32, i32, i32, i32) {
    %c0_i32 = arith.constant 0 : i32
    %c0_i32_0 = arith.constant 0 : i32
    return %arg0, %arg1, %arg2, %c0_i32 : i32, i32, i32, i32
  }
}

module attributes {stable_mosaic.version = 11 : i64} {
  func.func @_out_proj_kernel(%arg0: i32, %arg1: i32, %arg2: memref<1x8x32xbf16, #tpu.memory_space<vmem>>, %arg3: memref<32x32xbf16, #tpu.memory_space<vmem>>, %arg4: memref<1x32xf32, #tpu.memory_space<vmem>>, %arg5: memref<1x8x32xf32, #tpu.memory_space<vmem>>) attributes {dimension_semantics = [#tpu.dimension_semantics<parallel>, #tpu.dimension_semantics<parallel>], iteration_bounds = array<i64: 2, 1>, scalar_prefetch = 0 : i64, scratch_operands = 0 : i64, tpu.core_type = #tpu.core_type<tc>, window_params = [{transform_indices = @transform_0, window_bounds = array<i64: 1, 8, 32>}, {pipeline_mode = #tpu.pipeline_mode<synchronous>, transform_indices = @transform_1, window_bounds = array<i64: 32, 32>}, {pipeline_mode = #tpu.pipeline_mode<synchronous>, transform_indices = @transform_2, window_bounds = array<i64: 1, 32>}, {transform_indices = @transform_3, window_bounds = array<i64: 1, 8, 32>}]} {
    %c0 = arith.constant 0 : index
    %c0_0 = arith.constant 0 : index
    %c0_1 = arith.constant 0 : index
    %0 = vector.load %arg2[%c0, %c0_0, %c0_1] : memref<1x8x32xbf16, #tpu.memory_space<vmem>>, vector<1x8x32xbf16>
    %1 = vector.shape_cast %0 : vector<1x8x32xbf16> to vector<8x32xbf16>
    %c0_2 = arith.constant 0 : index
    %c0_3 = arith.constant 0 : index
    %2 = vector.load %arg3[%c0_2, %c0_3] : memref<32x32xbf16, #tpu.memory_space<vmem>>, vector<32x32xbf16>
    %cst = arith.constant dense<0.000000e+00> : vector<8x32xf32>
    %3 = tpu.matmul %1, %2, %cst {dimension_numbers = #tpu.dot_dimension_numbers<[1], [0], [0], [1], [0, 0, 1, 1], [], []>} : vector<8x32xbf16>, vector<32x32xbf16>, vector<8x32xf32> -> vector<8x32xf32>
    %c0_4 = arith.constant 0 : index
    %c0_5 = arith.constant 0 : index
    %4 = vector.load %arg4[%c0_4, %c0_5] : memref<1x32xf32, #tpu.memory_space<vmem>>, vector<1x32xf32>
    %5 = vector.broadcast %4 : vector<1x32xf32> to vector<8x32xf32>
    %6 = arith.addf %3, %5 : vector<8x32xf32>
    %c0_6 = arith.constant 0 : index
    %c0_7 = arith.constant 0 : index
    %c0_8 = arith.constant 0 : index
    %7 = vector.load %arg5[%c0_6, %c0_7, %c0_8] : memref<1x8x32xf32, #tpu.memory_space<vmem>>, vector<1x8x32xf32>
    %8 = vector.shape_cast %7 : vector<1x8x32xf32> to vector<8x32xf32>
    %9 = vector.shape_cast %6 : vector<8x32xf32> to vector<1x8x32xf32>
    tpu.vector_store %arg5[%c0_6, %c0_7, %c0_8], %9 {strides = array<i32>} : memref<1x8x32xf32, #tpu.memory_space<vmem>>, vector<1x8x32xf32>,
    return
  }
  func.func @transform_0(%arg0: i32, %arg1: i32) -> (i32, i32, i32) {
    %c0_i32 = arith.constant 0 : i32
    %c0_i32_0 = arith.constant 0 : i32
    return %arg0, %arg1, %c0_i32 : i32, i32, i32
  }
  func.func @transform_1(%arg0: i32, %arg1: i32) -> (i32, i32) {
    %c0_i32 = arith.constant 0 : i32
    %c0_i32_0 = arith.constant 0 : i32
    %c0_i32_1 = arith.constant 0 : i32
    return %c0_i32, %c0_i32_0 : i32, i32
  }
  func.func @transform_2(%arg0: i32, %arg1: i32) -> (i32, i32) {
    %c0_i32 = arith.constant 0 : i32
    %c0_i32_0 = arith.constant 0 : i32
    %c0_i32_1 = arith.constant 0 : i32
    return %c0_i32, %c0_i32_0 : i32, i32
  }
  func.func @transform_3(%arg0: i32, %arg1: i32) -> (i32, i32, i32) {
    %c0_i32 = arith.constant 0 : i32
    %c0_i32_0 = arith.constant 0 : i32
    return %arg0, %arg1, %c0_i32 : i32, i32, i32
  }
}

</mosaic_0001>

<llo_original>
// kernel: multi_head_attention.5
$region0: #{multi_head_attention.5}
  #allocation0 [shape = 'u32[]', space=smem, size = 0x4, offset = 0x4, fixed_abs, tag = 'smem constant byte address 0x4 - core index']
  #allocation1 [shape = 'u32[144,128]{1,0:T(1,128)}', space=vmem, size = 0x12000, scoped, tag = 'internal scratch']
  %s0 = inlined_call_operand.vmem [shape: bf16[2,8,32], index: 0, kind: input, shape index: {}]
  %s1 = inlined_call_operand.vmem [shape: bf16[32,32], index: 1, kind: input, shape index: {}]
  %s2 = inlined_call_operand.vmem [shape: f32[1,32], index: 2, kind: input, shape index: {}]
  %s3 = inlined_call_operand.hbm [shape: f32[2,8,32], index: 3, kind: output, shape index: {}]
  %s4 = sld [smem:[#allocation0]]
  $region45: #{multi_head_attention.5} parent=0
    _
  %s6 = ssub.s32 1, %s4
  %s7 = scalar_select 0, %s6, %s4
  $region1: #{multi_head_attention.5} parent=0
    #allocation2 [shape = 'u8[8192]{0}', space=vmem, size = 0x2000, scoped, tag = 'output window, operand 0']
    #allocation3 [shape = 's32[2]{0}', space=sflag, size = 0x8, scoped, tag = 'scoped memory for multi_head_attention.5']
    %8 = vsyncpa [#allocation3], 0
    %s9 = scalar_lea.sflag [#allocation3], 1
    %10 = vsyncpa %s9, 0
    loop: start=0, step=1, limit=4
    $region2: #{multi_head_attention.5} parent=1 // loop_pre_header
      _
    $region3: #{multi_head_attention.5} parent=1 // loop_header
      %s12 = sphi 0, %s16
      %p13 = scmp.ge.s32.totalorder %s12, 4
      %s19 = sphi 0, %s31
      %s20 = sphi 0, %s27
      %s21 = sphi 0, %s19
      %s22 = sphi 0, %s20
      %s23 = sphi 0, %s21
      %s24 = sphi 0, %s22
      %s36 = sphi 0, %s38
      %s39 = sphi 0, %s36
      %s40 = sphi 0, %s39
      %s56 = sphi 0, %s40
      %s60 = sphi 0, %s60
      %s62 = sphi 0, %s60
      %s63 = sphi 0, %s62
      %s77 = sphi 0, %s63
      %s81 = sphi 0, %s81
      %s83 = sphi 0, %s81
      %s84 = sphi 0, %s83
      %s98 = sphi 0, %s84
      %s106 = sphi 0, %s108
      %s109 = sphi 0, %s106
      %s110 = sphi 0, %s109
      %s126 = sphi 0, %s110
    $region4: #{multi_head_attention.5} parent=1 // loop_header_branch
      %15 = sbr.rel (%p13) target = $region8
    $region5: #{multi_head_attention.5} parent=1 // loop_body
      %s17 = ssub.s32 %s12, 1
      %s18 = ssub.s32 %s12, 2
      %s25 = sadd.s32 1, %s20
      %p26 = scmp.ge.s32.totalorder %s25, 1
      %s27 = scalar_select %p26, 0, %s25
      %s28 = sadd.s32 1, %s19
      %s29 = scalar_select %p26, %s28, %s19
      %p30 = scmp.ge.s32.totalorder %s29, 2
      %s31 = scalar_select %p30, 0, %s29
      %s32 = ssub.s32 %s19, %s31
      %s33 = ssub.s32 %s20, %s27
      %s34 = sor.u32 %s32, %s33
      %p35 = scmp.eq.s32.totalorder %s34, 0
      %s37 = sadd.s32 %s36, 1
      %s38 = scalar_select %p35, %s36, %s37
      %p41 = pneg %p35
      %p42 = scmp.eq.s32.totalorder %s12, 1
      %p43 = por %p41, %p42
      %p44 = scmp.ne.s32.totalorder %s36, %s39
      %p45 = scmp.eq.s32.totalorder %s12, 0
      %p46 = por %p44, %p45
      %p47 = scmp.ne.s32.totalorder %s36, %s39
      %p48 = scmp.eq.s32.totalorder %s17, 1
      %p49 = por %p47, %p48
      %p50 = scmp.ne.s32.totalorder %s39, %s40
      %p51 = scmp.eq.s32.totalorder %s17, 0
      %p52 = por %p50, %p51
      %p53 = scmp.ne.s32.totalorder %s39, %s40
      %p54 = scmp.eq.s32.totalorder %s18, 1
      %p55 = por %p53, %p54
      %p57 = scmp.ne.s32.totalorder %s40, %s56
      %p58 = scmp.eq.s32.totalorder %s18, 0
      %p59 = por %p57, %p58
      %s61 = sadd.s32 %s60, 1
      %p64 = scmp.eq.s32.totalorder %s12, 1
      %p65 = scmp.ne.s32.totalorder %s60, %s62
      %p66 = scmp.eq.s32.totalorder %s12, 0
      %p67 = por %p65, %p66
      %p68 = scmp.ne.s32.totalorder %s60, %s62
      %p69 = scmp.eq.s32.totalorder %s17, 1
      %p70 = por %p68, %p69
      %p71 = scmp.ne.s32.totalorder %s62, %s63
      %p72 = scmp.eq.s32.totalorder %s17, 0
      %p73 = por %p71, %p72
      %p74 = scmp.ne.s32.totalorder %s62, %s63
      %p75 = scmp.eq.s32.totalorder %s18, 1
      %p76 = por %p74, %p75
      %p78 = scmp.ne.s32.totalorder %s63, %s77
      %p79 = scmp.eq.s32.totalorder %s18, 0
      %p80 = por %p78, %p79
      %s82 = sadd.s32 %s81, 1
      %p85 = scmp.eq.s32.totalorder %s12, 1
      %p86 = scmp.ne.s32.totalorder %s81, %s83
      %p87 = scmp.eq.s32.totalorder %s12, 0
      %p88 = por %p86, %p87
      %p89 = scmp.ne.s32.totalorder %s81, %s83
      %p90 = scmp.eq.s32.totalorder %s17, 1
      %p91 = por %p89, %p90
      %p92 = scmp.ne.s32.totalorder %s83, %s84
      %p93 = scmp.eq.s32.totalorder %s17, 0
      %p94 = por %p92, %p93
      %p95 = scmp.ne.s32.totalorder %s83, %s84
      %p96 = scmp.eq.s32.totalorder %s18, 1
      %p97 = por %p95, %p96
      %p99 = scmp.ne.s32.totalorder %s84, %s98
      %p100 = scmp.eq.s32.totalorder %s18, 0
      %p101 = por %p99, %p100
      %s102 = ssub.s32 %s19, %s31
      %s103 = ssub.s32 %s20, %s27
      %s104 = sor.u32 %s102, %s103
      %p105 = scmp.eq.s32.totalorder %s104, 0
      %s107 = sadd.s32 %s106, 1
      %s108 = scalar_select %p105, %s106, %s107
      %p111 = pneg %p105
      %p112 = scmp.eq.s32.totalorder %s12, 1
      %p113 = por %p111, %p112
      %p114 = scmp.ne.s32.totalorder %s106, %s109
      %p115 = scmp.eq.s32.totalorder %s12, 0
      %p116 = por %p114, %p115
      %p117 = scmp.ne.s32.totalorder %s106, %s109
      %p118 = scmp.eq.s32.totalorder %s17, 1
      %p119 = por %p117, %p118
      %p120 = scmp.ne.s32.totalorder %s109, %s110
      %p121 = scmp.eq.s32.totalorder %s17, 0
      %p122 = por %p120, %p121
      %p123 = scmp.ne.s32.totalorder %s109, %s110
      %p124 = scmp.eq.s32.totalorder %s18, 1
      %p125 = por %p123, %p124
      %p127 = scmp.ne.s32.totalorder %s110, %s126
      %p128 = scmp.eq.s32.totalorder %s18, 0
      %p129 = por %p127, %p128
      %p130 = scmp.le.s32.totalorder 1, %s12
      %p131 = scmp.lt.s32.totalorder %s12, 3
      %p132 = pnand %p130, %p131
      %p133 = pneg %p132
      // Predicated region
      $region9: #{multi_head_attention.5} parent=5 // pred_check
        _
      $region10: #{multi_head_attention.5} parent=5 // pred_check_branch
        %135 = sbr.rel (%p132) target = $region12
      $region11: #{multi_head_attention.5} parent=5 // pred_region
        %s136 = ssub.s32 %s12, 1
        // Predicated region
        $region13: #{multi_head_attention.5} parent=11 // pred_check
          %p137 = pneg %p73
        $region14: #{multi_head_attention.5} parent=11 // pred_check_branch
          %139 = sbr.rel (%p137) target = $region16
        $region15: #{multi_head_attention.5} parent=11 // pred_region
          _
        $region16: #{multi_head_attention.5} parent=11 // pred_fallthru
          _
        // Predicated region
        $region17: #{multi_head_attention.5} parent=11 // pred_check
          %p140 = pneg %p94
        $region18: #{multi_head_attention.5} parent=11 // pred_check_branch
          %142 = sbr.rel (%p140) target = $region20
        $region19: #{multi_head_attention.5} parent=11 // pred_region
          _
        $region20: #{multi_head_attention.5} parent=11 // pred_fallthru
          _
      $region12: #{multi_head_attention.5} parent=5 // pred_fallthru
        _
      %p143 = scmp.lt.s32.totalorder %s12, 2
      // Predicated region
      $region21: #{multi_head_attention.5} parent=5 // pred_check
        %p144 = pneg %p143
      $region22: #{multi_head_attention.5} parent=5 // pred_check_branch
        %146 = sbr.rel (%p144) target = $region24
      $region23: #{multi_head_attention.5} parent=5 // pred_region
        // Predicated region
        $region25: #{multi_head_attention.5} parent=23 // pred_check
          %p147 = pneg %p46
        $region26: #{multi_head_attention.5} parent=23 // pred_check_branch
          %149 = sbr.rel (%p147) target = $region28
        $region27: #{multi_head_attention.5} parent=23 // pred_region
          %p150 = scmp.lt.s32.totalorder %s19, 1
          %s151 = scalar_select %p150, %s19, 1
          %p152 = scmp.lt.s32.totalorder %s20, 0
          %s153 = scalar_select %p152, %s20, 0
          %s154 = sadd.s32 %s153, %s151
          %s155 = smul.addr %s154, 4
          %s156 = scalar_lea.vmem %s0, %s155
        $region28: #{multi_head_attention.5} parent=23 // pred_fallthru
          _
      $region24: #{multi_head_attention.5} parent=5 // pred_fallthru
        _
      %p157 = scmp.le.s32.totalorder 1, %s12
      %p158 = scmp.lt.s32.totalorder %s12, 3
      %p159 = pnand %p157, %p158
      %p160 = pneg %p159
      // Predicated region
      $region29: #{multi_head_attention.5} parent=5 // pred_check
        _
      $region30: #{multi_head_attention.5} parent=5 // pred_check_branch
        %162 = sbr.rel (%p159) target = $region32
      $region31: #{multi_head_attention.5} parent=5 // pred_region
        %s163 = ssub.s32 %s12, 1
        %p164 = scmp.lt.s32.totalorder %s21, 1
        %s165 = scalar_select %p164, %s21, 1
        %p166 = scmp.lt.s32.totalorder %s22, 0
        %s167 = scalar_select %p166, %s22, 0
        %s168 = sadd.s32 %s167, %s165
        %s169 = smul.addr %s168, 4
        %s170 = scalar_lea.vmem %s0, %s169
        %p171 = pneg %p52
        %p172 = pneg %p49
        %p173 = pneg %p73
        %p174 = pneg %p70
        %p175 = pneg %p94
        %p176 = pneg %p91
        %p177 = pneg %p122
        %p178 = pneg %p119
        %s179 = sand.u32 %s109, 1
        %s180 = scalar_lea.sflag [#allocation3], %s179
        %s181 = sand.u32 %s109, 1
        %s182 = smul.addr %s181, 8
        %s183 = scalar_lea.vmem [#allocation2], %s182
        %p184 = scmp.lt.s32.totalorder %s21, 1
        %s185 = scalar_select %p184, %s21, 1
        %p186 = scmp.lt.s32.totalorder %s22, 0
        %s187 = scalar_select %p186, %s22, 0
        %s188 = sadd.s32 %s187, %s185
        %s189 = smul.addr %s188, 4
        %s190 = scalar_lea.vmem %s0, %s189
        %v192 = vld [vmem:[%s190] sm:$0xf]
        %v193 = vld [vmem:[%s1] sm:$0xf]
        %v194 = vld [vmem:[%s1 + $0x4] sm:$0xf]
        %v195 = vld [vmem:[%s1 + $0x8] sm:$0xf]
        %v196 = vld [vmem:[%s1 + $0xc] sm:$0xf]
        %v197 = vld [vmem:[%s2] sm:$0x1]
        %v199 = vlaneseq
        %v200 = vshrl.u32 %v199, 7
        %v201 = vsub.s32 0, %v200
        %v202 = vrot.slane %v197, %v201
        %v208 = vunpack.c.l.b16 %v193
        %v209 = vunpack.c.l.b16 %v194
        %v210 = vunpack.c.l.b16 %v195
        %v211 = vunpack.c.l.b16 %v196
        %v212 = vpack.c.b16 %v209, %v208
        %v213 = vpack.c.b16 %v211, %v210
        %vm216 = vcmask 261120
        %v218 = vsel %vm216, %v192, 0
        %220 = vmatprep.subr.bf16.mxu0 0
        %221 = vmatpush1.bf16.msra.mxu0 %v212
        %222 = vmatprep.subr.bf16.mxu0 0
        %223 = vmatpush1.bf16.msra.mxu0 %v213
        %224 = vmatprep.subr.bf16.mxu0 0
        %225 = vmatpush1.bf16.msra.mxu0 0
        %226 = vmatprep.subr.bf16.mxu0 0
        %227 = vmatpush1.bf16.msra.mxu0 0
        %228 = vmatprep.subr.bf16.mxu0 0
        %229 = vmatpush1.bf16.msra.mxu0 0
        %230 = vmatprep.subr.bf16.mxu0 0
        %231 = vmatpush1.bf16.msra.mxu0 0
        %232 = vmatprep.subr.bf16.mxu0 0
        %233 = vmatpush1.bf16.msra.mxu0 0
        %234 = vmatprep.subr.bf16.mxu0 0
        %235 = vmatpush1.bf16.msra.mxu0 0
        %236 = vmatprep.subr.bf16.mxu0 0
        %237 = vmatpush1.bf16.msra.mxu0 0
        %238 = vmatprep.subr.bf16.mxu0 0
        %239 = vmatpush1.bf16.msra.mxu0 0
        %240 = vmatprep.subr.bf16.mxu0 0
        %241 = vmatpush1.bf16.msra.mxu0 0
        %242 = vmatprep.subr.bf16.mxu0 0
        %243 = vmatpush1.bf16.msra.mxu0 0
        %244 = vmatprep.subr.bf16.mxu0 0
        %245 = vmatpush1.bf16.msra.mxu0 0
        %246 = vmatprep.subr.bf16.mxu0 0
        %247 = vmatpush1.bf16.msra.mxu0 0
        %248 = vmatprep.subr.bf16.mxu0 0
        %249 = vmatpush1.bf16.msra.mxu0 0
        %250 = vmatprep.subr.bf16.mxu0 0
        %251 = vmatpush1.bf16.msra.mxu0 0
        %252 = vmatprep.mubr.bf16.mxu0 0
        %253 = vmatmul.mubr.bf16.gmra.mrb[0].mxu0 %v218
        %v254 = vpop.f32.mrb[0].mxu0
        %v255 = vadd.f32 %v202, %v254
        %v256 = vpop.f32.mrb[0].mxu0
        %v257 = vpop.f32.mrb[0].mxu0
        %v258 = vpop.f32.mrb[0].mxu0
        %259 = vdwg.mxu0
        %260 = vst.msk [vmem:[%s183] sm:$0xff] %vm216, %v255
        %s261 = sand.u32 %s109, 1
        %s262 = scalar_lea.sflag [#allocation3], %s261
        %s263 = sand.u32 %s109, 1
        %s264 = smul.addr %s263, 8
        %s265 = scalar_lea.vmem [#allocation2], %s264
        // Predicated region
        $region33: #{multi_head_attention.5} parent=31 // pred_check
          %p266 = pneg %p119
        $region34: #{multi_head_attention.5} parent=31 // pred_check_branch
          %268 = sbr.rel (%p266) target = $region36
        $region35: #{multi_head_attention.5} parent=31 // pred_region
          %s270 = ssub.s32 128, 128
          %271 = vsyncadd %s262, %s270
          %s272 = sadd.s32 %s22, %s21
          %s273 = smul.addr %s272, 128
          %s274 = scalar_lea.hbm %s3, %s273
          %s276 = sshll.u32 %s265, 4
          %s277 = int_to_ptr.vmem [resolvable:$true] %s276
          %279 = dma.vmem_to_hbm [thread:$0]  %s277, 128, %s274, %s262
        $region36: #{multi_head_attention.5} parent=31 // pred_fallthru
          _
      $region32: #{multi_head_attention.5} parent=5 // pred_fallthru
        _
      %p280 = scmp.le.s32.totalorder 2, %s12
      // Predicated region
      $region37: #{multi_head_attention.5} parent=5 // pred_check
        %p281 = pneg %p280
      $region38: #{multi_head_attention.5} parent=5 // pred_check_branch
        %283 = sbr.rel (%p281) target = $region40
      $region39: #{multi_head_attention.5} parent=5 // pred_region
        %s284 = ssub.s32 %s12, 2
        // Predicated region
        $region41: #{multi_head_attention.5} parent=39 // pred_check
          %p285 = pneg %p125
        $region42: #{multi_head_attention.5} parent=39 // pred_check_branch
          %287 = sbr.rel (%p285) target = $region44
        $region43: #{multi_head_attention.5} parent=39 // pred_region
          %s288 = sand.u32 %s110, 1
          %s289 = scalar_lea.sflag [#allocation3], %s288
          %s290 = sand.u32 %s110, 1
          %s291 = smul.addr %s290, 8
          %s292 = scalar_lea.vmem [#allocation2], %s291
          %293 = dma.done %s289, 128
        $region44: #{multi_head_attention.5} parent=39 // pred_fallthru
          _
      $region40: #{multi_head_attention.5} parent=5 // pred_fallthru
        _
    $region6: #{multi_head_attention.5} parent=1 // loop_footer
      %s16 = sadd.s32 1, %s12
    $region7: #{multi_head_attention.5} parent=1 // loop_footer_branch
      %11 = sbr.rel target = $region3
    $region8: #{multi_head_attention.5} parent=1 // loop_exit
      _
    %294 = vsyncpa [#allocation3], 1
    %s295 = scalar_lea.sflag [#allocation3], 1
    %296 = vsyncpa %s295, 1

// kernel: multi_head_attention.3
$region0: #{multi_head_attention.3}
  #allocation0 [shape = 'u32[]', space=smem, size = 0x4, offset = 0x4, fixed_abs, tag = 'smem constant byte address 0x4 - core index']
  #allocation1 [shape = 'u32[144,128]{1,0:T(1,128)}', space=vmem, size = 0x12000, scoped, tag = 'internal scratch']
  %s0 = inlined_call_operand.vmem [shape: bf16[2,8,32], index: 0, kind: input, shape index: {}]
  %s1 = inlined_call_operand.vmem [shape: bf16[4,32,24], index: 1, kind: input, shape index: {}]
  %s2 = inlined_call_operand.vmem [shape: f32[4,1,24], index: 2, kind: input, shape index: {}]
  %s3 = inlined_call_operand.vmem [shape: bf16[2,4,8,8], index: 3, kind: output, shape index: {0}]
  %s4 = inlined_call_operand.vmem [shape: bf16[2,4,8,8], index: 4, kind: output, shape index: {1}]
  %s5 = inlined_call_operand.vmem [shape: bf16[2,4,8,8], index: 5, kind: output, shape index: {2}]
  %6 = xla_tuple %s3, %s4, %s5
  %s7 = sld [smem:[#allocation0]]
  $region61: #{multi_head_attention.3} parent=0
    _
  %s9 = ssub.s32 1, %s7
  %s10 = scalar_select 0, %s9, %s7
  loop: start=0, step=1, limit=10
  $region2: #{multi_head_attention.3} parent=0 // loop_pre_header
    _
  $region3: #{multi_head_attention.3} parent=0 // loop_header
    %s12 = sphi 0, %s16
    %p13 = scmp.ge.s32.totalorder %s12, 10
    %s19 = sphi 0, %s38
    %s20 = sphi 0, %s34
    %s21 = sphi 0, %s30
    %s22 = sphi 0, %s19
    %s23 = sphi 0, %s20
    %s24 = sphi 0, %s21
    %s25 = sphi 0, %s22
    %s26 = sphi 0, %s23
    %s27 = sphi 0, %s24
    %s43 = sphi 0, %s45
    %s46 = sphi 0, %s43
    %s47 = sphi 0, %s46
    %s63 = sphi 0, %s47
    %s69 = sphi 0, %s71
    %s72 = sphi 0, %s69
    %s73 = sphi 0, %s72
    %s89 = sphi 0, %s73
    %s95 = sphi 0, %s97
    %s98 = sphi 0, %s95
    %s99 = sphi 0, %s98
    %s115 = sphi 0, %s99
    %s125 = sphi 0, %s127
    %s128 = sphi 0, %s125
    %s129 = sphi 0, %s128
    %s145 = sphi 0, %s129
    %s155 = sphi 0, %s157
    %s158 = sphi 0, %s155
    %s159 = sphi 0, %s158
    %s175 = sphi 0, %s159
    %s185 = sphi 0, %s187
    %s188 = sphi 0, %s185
    %s189 = sphi 0, %s188
    %s205 = sphi 0, %s189
  $region4: #{multi_head_attention.3} parent=0 // loop_header_branch
    %15 = sbr.rel (%p13) target = $region8
  $region5: #{multi_head_attention.3} parent=0 // loop_body
    %s17 = ssub.s32 %s12, 1
    %s18 = ssub.s32 %s12, 2
    %s28 = sadd.s32 1, %s21
    %p29 = scmp.ge.s32.totalorder %s28, 4
    %s30 = scalar_select %p29, 0, %s28
    %s31 = sadd.s32 1, %s20
    %s32 = scalar_select %p29, %s31, %s20
    %p33 = scmp.ge.s32.totalorder %s32, 1
    %s34 = scalar_select %p33, 0, %s32
    %s35 = sadd.s32 1, %s19
    %s36 = scalar_select %p33, %s35, %s19
    %p37 = scmp.ge.s32.totalorder %s36, 2
    %s38 = scalar_select %p37, 0, %s36
    %s39 = ssub.s32 %s19, %s38
    %s40 = ssub.s32 %s20, %s34
    %s41 = sor.u32 %s39, %s40
    %p42 = scmp.eq.s32.totalorder %s41, 0
    %s44 = sadd.s32 %s43, 1
    %s45 = scalar_select %p42, %s43, %s44
    %p48 = pneg %p42
    %p49 = scmp.eq.s32.totalorder %s12, 7
    %p50 = por %p48, %p49
    %p51 = scmp.ne.s32.totalorder %s43, %s46
    %p52 = scmp.eq.s32.totalorder %s12, 0
    %p53 = por %p51, %p52
    %p54 = scmp.ne.s32.totalorder %s43, %s46
    %p55 = scmp.eq.s32.totalorder %s17, 7
    %p56 = por %p54, %p55
    %p57 = scmp.ne.s32.totalorder %s46, %s47
    %p58 = scmp.eq.s32.totalorder %s17, 0
    %p59 = por %p57, %p58
    %p60 = scmp.ne.s32.totalorder %s46, %s47
    %p61 = scmp.eq.s32.totalorder %s18, 7
    %p62 = por %p60, %p61
    %p64 = scmp.ne.s32.totalorder %s47, %s63
    %p65 = scmp.eq.s32.totalorder %s18, 0
    %p66 = por %p64, %p65
    %s67 = ssub.s32 %s21, %s30
    %p68 = scmp.eq.s32.totalorder %s67, 0
    %s70 = sadd.s32 %s69, 1
    %s71 = scalar_select %p68, %s69, %s70
    %p74 = pneg %p68
    %p75 = scmp.eq.s32.totalorder %s12, 7
    %p76 = por %p74, %p75
    %p77 = scmp.ne.s32.totalorder %s69, %s72
    %p78 = scmp.eq.s32.totalorder %s12, 0
    %p79 = por %p77, %p78
    %p80 = scmp.ne.s32.totalorder %s69, %s72
    %p81 = scmp.eq.s32.totalorder %s17, 7
    %p82 = por %p80, %p81
    %p83 = scmp.ne.s32.totalorder %s72, %s73
    %p84 = scmp.eq.s32.totalorder %s17, 0
    %p85 = por %p83, %p84
    %p86 = scmp.ne.s32.totalorder %s72, %s73
    %p87 = scmp.eq.s32.totalorder %s18, 7
    %p88 = por %p86, %p87
    %p90 = scmp.ne.s32.totalorder %s73, %s89
    %p91 = scmp.eq.s32.totalorder %s18, 0
    %p92 = por %p90, %p91
    %s93 = ssub.s32 %s21, %s30
    %p94 = scmp.eq.s32.totalorder %s93, 0
    %s96 = sadd.s32 %s95, 1
    %s97 = scalar_select %p94, %s95, %s96
    %p100 = pneg %p94
    %p101 = scmp.eq.s32.totalorder %s12, 7
    %p102 = por %p100, %p101
    %p103 = scmp.ne.s32.totalorder %s95, %s98
    %p104 = scmp.eq.s32.totalorder %s12, 0
    %p105 = por %p103, %p104
    %p106 = scmp.ne.s32.totalorder %s95, %s98
    %p107 = scmp.eq.s32.totalorder %s17, 7
    %p108 = por %p106, %p107
    %p109 = scmp.ne.s32.totalorder %s98, %s99
    %p110 = scmp.eq.s32.totalorder %s17, 0
    %p111 = por %p109, %p110
    %p112 = scmp.ne.s32.totalorder %s98, %s99
    %p113 = scmp.eq.s32.totalorder %s18, 7
    %p114 = por %p112, %p113
    %p116 = scmp.ne.s32.totalorder %s99, %s115
    %p117 = scmp.eq.s32.totalorder %s18, 0
    %p118 = por %p116, %p117
    %s119 = ssub.s32 %s19, %s38
    %s120 = ssub.s32 %s21, %s30
    %s121 = sor.u32 %s119, %s120
    %s122 = ssub.s32 %s20, %s34
    %s123 = sor.u32 %s121, %s122
    %p124 = scmp.eq.s32.totalorder %s123, 0
    %s126 = sadd.s32 %s125, 1
    %s127 = scalar_select %p124, %s125, %s126
    %p130 = pneg %p124
    %p131 = scmp.eq.s32.totalorder %s12, 7
    %p132 = por %p130, %p131
    %p133 = scmp.ne.s32.totalorder %s125, %s128
    %p134 = scmp.eq.s32.totalorder %s12, 0
    %p135 = por %p133, %p134
    %p136 = scmp.ne.s32.totalorder %s125, %s128
    %p137 = scmp.eq.s32.totalorder %s17, 7
    %p138 = por %p136, %p137
    %p139 = scmp.ne.s32.totalorder %s128, %s129
    %p140 = scmp.eq.s32.totalorder %s17, 0
    %p141 = por %p139, %p140
    %p142 = scmp.ne.s32.totalorder %s128, %s129
    %p143 = scmp.eq.s32.totalorder %s18, 7
    %p144 = por %p142, %p143
    %p146 = scmp.ne.s32.totalorder %s129, %s145
    %p147 = scmp.eq.s32.totalorder %s18, 0
    %p148 = por %p146, %p147
    %s149 = ssub.s32 %s19, %s38
    %s150 = ssub.s32 %s21, %s30
    %s151 = sor.u32 %s149, %s150
    %s152 = ssub.s32 %s20, %s34
    %s153 = sor.u32 %s151, %s152
    %p154 = scmp.eq.s32.totalorder %s153, 0
    %s156 = sadd.s32 %s155, 1
    %s157 = scalar_select %p154, %s155, %s156
    %p160 = pneg %p154
    %p161 = scmp.eq.s32.totalorder %s12, 7
    %p162 = por %p160, %p161
    %p163 = scmp.ne.s32.totalorder %s155, %s158
    %p164 = scmp.eq.s32.totalorder %s12, 0
    %p165 = por %p163, %p164
    %p166 = scmp.ne.s32.totalorder %s155, %s158
    %p167 = scmp.eq.s32.totalorder %s17, 7
    %p168 = por %p166, %p167
    %p169 = scmp.ne.s32.totalorder %s158, %s159
    %p170 = scmp.eq.s32.totalorder %s17, 0
    %p171 = por %p169, %p170
    %p172 = scmp.ne.s32.totalorder %s158, %s159
    %p173 = scmp.eq.s32.totalorder %s18, 7
    %p174 = por %p172, %p173
    %p176 = scmp.ne.s32.totalorder %s159, %s175
    %p177 = scmp.eq.s32.totalorder %s18, 0
    %p178 = por %p176, %p177
    %s179 = ssub.s32 %s19, %s38
    %s180 = ssub.s32 %s21, %s30
    %s181 = sor.u32 %s179, %s180
    %s182 = ssub.s32 %s20, %s34
    %s183 = sor.u32 %s181, %s182
    %p184 = scmp.eq.s32.totalorder %s183, 0
    %s186 = sadd.s32 %s185, 1
    %s187 = scalar_select %p184, %s185, %s186
    %p190 = pneg %p184
    %p191 = scmp.eq.s32.totalorder %s12, 7
    %p192 = por %p190, %p191
    %p193 = scmp.ne.s32.totalorder %s185, %s188
    %p194 = scmp.eq.s32.totalorder %s12, 0
    %p195 = por %p193, %p194
    %p196 = scmp.ne.s32.totalorder %s185, %s188
    %p197 = scmp.eq.s32.totalorder %s17, 7
    %p198 = por %p196, %p197
    %p199 = scmp.ne.s32.totalorder %s188, %s189
    %p200 = scmp.eq.s32.totalorder %s17, 0
    %p201 = por %p199, %p200
    %p202 = scmp.ne.s32.totalorder %s188, %s189
    %p203 = scmp.eq.s32.totalorder %s18, 7
    %p204 = por %p202, %p203
    %p206 = scmp.ne.s32.totalorder %s189, %s205
    %p207 = scmp.eq.s32.totalorder %s18, 0
    %p208 = por %p206, %p207
    %p209 = scmp.le.s32.totalorder 1, %s12
    %p210 = scmp.lt.s32.totalorder %s12, 9
    %p211 = pnand %p209, %p210
    %p212 = pneg %p211
    // Predicated region
    $region9: #{multi_head_attention.3} parent=5 // pred_check
      _
    $region10: #{multi_head_attention.3} parent=5 // pred_check_branch
      %214 = sbr.rel (%p211) target = $region12
    $region11: #{multi_head_attention.3} parent=5 // pred_region
      %s215 = ssub.s32 %s12, 1
    $region12: #{multi_head_attention.3} parent=5 // pred_fallthru
      _
    %p216 = scmp.lt.s32.totalorder %s12, 8
    // Predicated region
    $region13: #{multi_head_attention.3} parent=5 // pred_check
      %p217 = pneg %p216
    $region14: #{multi_head_attention.3} parent=5 // pred_check_branch
      %219 = sbr.rel (%p217) target = $region16
    $region15: #{multi_head_attention.3} parent=5 // pred_region
      // Predicated region
      $region17: #{multi_head_attention.3} parent=15 // pred_check
        %p220 = pneg %p53
      $region18: #{multi_head_attention.3} parent=15 // pred_check_branch
        %222 = sbr.rel (%p220) target = $region20
      $region19: #{multi_head_attention.3} parent=15 // pred_region
        %p223 = scmp.lt.s32.totalorder %s19, 1
        %s224 = scalar_select %p223, %s19, 1
        %p225 = scmp.lt.s32.totalorder %s20, 0
        %s226 = scalar_select %p225, %s20, 0
        %s227 = sadd.s32 %s226, %s224
        %s228 = smul.addr %s227, 4
        %s229 = scalar_lea.vmem %s0, %s228
      $region20: #{multi_head_attention.3} parent=15 // pred_fallthru
        _
      // Predicated region
      $region21: #{multi_head_attention.3} parent=15 // pred_check
        %p230 = pneg %p79
      $region22: #{multi_head_attention.3} parent=15 // pred_check_branch
        %232 = sbr.rel (%p230) target = $region24
      $region23: #{multi_head_attention.3} parent=15 // pred_region
        %p233 = scmp.lt.s32.totalorder %s21, 3
        %s234 = scalar_select %p233, %s21, 3
        %s235 = smul.addr %s234, 4
        %s236 = smul.addr %s235, 4
        %s237 = scalar_lea.vmem %s1, %s236
      $region24: #{multi_head_attention.3} parent=15 // pred_fallthru
        _
      // Predicated region
      $region25: #{multi_head_attention.3} parent=15 // pred_check
        %p238 = pneg %p105
      $region26: #{multi_head_attention.3} parent=15 // pred_check_branch
        %240 = sbr.rel (%p238) target = $region28
      $region27: #{multi_head_attention.3} parent=15 // pred_region
        %p241 = scmp.lt.s32.totalorder %s21, 3
        %s242 = scalar_select %p241, %s21, 3
        %s243 = scalar_lea.vmem %s2, %s242
      $region28: #{multi_head_attention.3} parent=15 // pred_fallthru
        _
    $region16: #{multi_head_attention.3} parent=5 // pred_fallthru
      _
    %p244 = scmp.le.s32.totalorder 1, %s12
    %p245 = scmp.lt.s32.totalorder %s12, 9
    %p246 = pnand %p244, %p245
    %p247 = pneg %p246
    // Predicated region
    $region29: #{multi_head_attention.3} parent=5 // pred_check
      _
    $region30: #{multi_head_attention.3} parent=5 // pred_check_branch
      %249 = sbr.rel (%p246) target = $region32
    $region31: #{multi_head_attention.3} parent=5 // pred_region
      %s250 = ssub.s32 %s12, 1
      %p251 = scmp.lt.s32.totalorder %s22, 1
      %s252 = scalar_select %p251, %s22, 1
      %p253 = scmp.lt.s32.totalorder %s23, 0
      %s254 = scalar_select %p253, %s23, 0
      %s255 = sadd.s32 %s254, %s252
      %s256 = smul.addr %s255, 4
      %s257 = scalar_lea.vmem %s0, %s256
      %p258 = pneg %p59
      %p259 = pneg %p56
      %p260 = scmp.lt.s32.totalorder %s24, 3
      %s261 = scalar_select %p260, %s24, 3
      %s262 = smul.addr %s261, 4
      %s263 = smul.addr %s262, 4
      %s264 = scalar_lea.vmem %s1, %s263
      %p265 = pneg %p85
      %p266 = pneg %p82
      %p267 = scmp.lt.s32.totalorder %s24, 3
      %s268 = scalar_select %p267, %s24, 3
      %s269 = scalar_lea.vmem %s2, %s268
      %p270 = pneg %p111
      %p271 = pneg %p108
      %p272 = pneg %p141
      %p273 = pneg %p138
      %p274 = scmp.lt.s32.totalorder %s22, 1
      %s275 = scalar_select %p274, %s22, 1
      %p276 = scmp.lt.s32.totalorder %s24, 3
      %s277 = scalar_select %p276, %s24, 3
      %p278 = scmp.lt.s32.totalorder %s23, 0
      %s279 = scalar_select %p278, %s23, 0
      %s280 = sadd.s32 %s279, %s277
      %s281 = smul.addr %s275, 4
      %s282 = sadd.s32 %s280, %s281
      %s283 = smul.addr %s282, 4
      %s284 = scalar_lea.vmem %s3, %s283
      %p285 = pneg %p171
      %p286 = pneg %p168
      %p287 = scmp.lt.s32.totalorder %s22, 1
      %s288 = scalar_select %p287, %s22, 1
      %p289 = scmp.lt.s32.totalorder %s24, 3
      %s290 = scalar_select %p289, %s24, 3
      %p291 = scmp.lt.s32.totalorder %s23, 0
      %s292 = scalar_select %p291, %s23, 0
      %s293 = sadd.s32 %s292, %s290
      %s294 = smul.addr %s288, 4
      %s295 = sadd.s32 %s293, %s294
      %s296 = smul.addr %s295, 4
      %s297 = scalar_lea.vmem %s4, %s296
      %p298 = pneg %p201
      %p299 = pneg %p198
      %p300 = scmp.lt.s32.totalorder %s22, 1
      %s301 = scalar_select %p300, %s22, 1
      %p302 = scmp.lt.s32.totalorder %s24, 3
      %s303 = scalar_select %p302, %s24, 3
      %p304 = scmp.lt.s32.totalorder %s23, 0
      %s305 = scalar_select %p304, %s23, 0
      %s306 = sadd.s32 %s305, %s303
      %s307 = smul.addr %s301, 4
      %s308 = sadd.s32 %s306, %s307
      %s309 = smul.addr %s308, 4
      %s310 = scalar_lea.vmem %s5, %s309
      %p311 = scmp.lt.s32.totalorder %s22, 1
      %s312 = scalar_select %p311, %s22, 1
      %p313 = scmp.lt.s32.totalorder %s23, 0
      %s314 = scalar_select %p313, %s23, 0
      %s315 = sadd.s32 %s314, %s312
      %s316 = smul.addr %s315, 4
      %s317 = scalar_lea.vmem %s0, %s316
      %p318 = scmp.lt.s32.totalorder %s24, 3
      %s319 = scalar_select %p318, %s24, 3
      %s320 = smul.addr %s319, 4
      %s321 = smul.addr %s320, 4
      %s322 = scalar_lea.vmem %s1, %s321
      %p323 = scmp.lt.s32.totalorder %s24, 3
      %s324 = scalar_select %p323, %s24, 3
      %s325 = scalar_lea.vmem %s2, %s324
      %p326 = scmp.lt.s32.totalorder %s22, 1
      %s327 = scalar_select %p326, %s22, 1
      %p328 = scmp.lt.s32.totalorder %s24, 3
      %s329 = scalar_select %p328, %s24, 3
      %p330 = scmp.lt.s32.totalorder %s23, 0
      %s331 = scalar_select %p330, %s23, 0
      %s332 = sadd.s32 %s331, %s329
      %s333 = smul.addr %s327, 4
      %s334 = sadd.s32 %s332, %s333
      %s335 = smul.addr %s334, 4
      %s336 = scalar_lea.vmem %s3, %s335
      %p337 = scmp.lt.s32.totalorder %s22, 1
      %s338 = scalar_select %p337, %s22, 1
      %p339 = scmp.lt.s32.totalorder %s24, 3
      %s340 = scalar_select %p339, %s24, 3
      %p341 = scmp.lt.s32.totalorder %s23, 0
      %s342 = scalar_select %p341, %s23, 0
      %s343 = sadd.s32 %s342, %s340
      %s344 = smul.addr %s338, 4
      %s345 = sadd.s32 %s343, %s344
      %s346 = smul.addr %s345, 4
      %s347 = scalar_lea.vmem %s4, %s346
      %p348 = scmp.lt.s32.totalorder %s22, 1
      %s349 = scalar_select %p348, %s22, 1
      %p350 = scmp.lt.s32.totalorder %s24, 3
      %s351 = scalar_select %p350, %s24, 3
      %p352 = scmp.lt.s32.totalorder %s23, 0
      %s353 = scalar_select %p352, %s23, 0
      %s354 = sadd.s32 %s353, %s351
      %s355 = smul.addr %s349, 4
      %s356 = sadd.s32 %s354, %s355
      %s357 = smul.addr %s356, 4
      %s358 = scalar_lea.vmem %s5, %s357
      %v360 = vld [vmem:[%s317] sm:$0xf]
      %v361 = vld [vmem:[%s322] sm:$0xf]
      %v362 = vld [vmem:[%s322 + $0x4] sm:$0xf]
      %v363 = vld [vmem:[%s322 + $0x8] sm:$0xf]
      %v364 = vld [vmem:[%s322 + $0xc] sm:$0xf]
      %v365 = vld [vmem:[%s325] sm:$0x1]
      %v367 = vlaneseq
      %v368 = vshrl.u32 %v367, 7
      %v369 = vsub.s32 0, %v368
      %v370 = vrot.slane %v365, %v369
      %v376 = vunpack.c.l.b16 %v361
      %v377 = vunpack.c.l.b16 %v362
      %v378 = vunpack.c.l.b16 %v363
      %v379 = vunpack.c.l.b16 %v364
      %v380 = vpack.c.b16 %v377, %v376
      %v381 = vpack.c.b16 %v379, %v378
      %vm384 = vcmask 261120
      %v386 = vsel %vm384, %v360, 0
      %388 = vmatprep.subr.bf16.mxu0 0
      %389 = vmatpush1.bf16.msra.mxu0 %v380
      %390 = vmatprep.subr.bf16.mxu0 0
      %391 = vmatpush1.bf16.msra.mxu0 %v381
      %392 = vmatprep.subr.bf16.mxu0 0
      %393 = vmatpush1.bf16.msra.mxu0 0
      %394 = vmatprep.subr.bf16.mxu0 0
      %395 = vmatpush1.bf16.msra.mxu0 0
      %396 = vmatprep.subr.bf16.mxu0 0
      %397 = vmatpush1.bf16.msra.mxu0 0
      %398 = vmatprep.subr.bf16.mxu0 0
      %399 = vmatpush1.bf16.msra.mxu0 0
      %400 = vmatprep.subr.bf16.mxu0 0
      %401 = vmatpush1.bf16.msra.mxu0 0
      %402 = vmatprep.subr.bf16.mxu0 0
      %403 = vmatpush1.bf16.msra.mxu0 0
      %404 = vmatprep.subr.bf16.mxu0 0
      %405 = vmatpush1.bf16.msra.mxu0 0
      %406 = vmatprep.subr.bf16.mxu0 0
      %407 = vmatpush1.bf16.msra.mxu0 0
      %408 = vmatprep.subr.bf16.mxu0 0
      %409 = vmatpush1.bf16.msra.mxu0 0
      %410 = vmatprep.subr.bf16.mxu0 0
      %411 = vmatpush1.bf16.msra.mxu0 0
      %412 = vmatprep.subr.bf16.mxu0 0
      %413 = vmatpush1.bf16.msra.mxu0 0
      %414 = vmatprep.subr.bf16.mxu0 0
      %415 = vmatpush1.bf16.msra.mxu0 0
      %416 = vmatprep.subr.bf16.mxu0 0
      %417 = vmatpush1.bf16.msra.mxu0 0
      %418 = vmatprep.subr.bf16.mxu0 0
      %419 = vmatpush1.bf16.msra.mxu0 0
      %420 = vmatprep.mubr.bf16.mxu0 0
      %421 = vmatmul.mubr.bf16.gmra.mrb[0].mxu0 %v386
      %v422 = vpop.f32.mrb[0].mxu0
      %v423 = vadd.f32 %v370, %v422
      %v424 = vpop.f32.mrb[0].mxu0
      %v425 = vpop.f32.mrb[0].mxu0
      %v426 = vpop.f32.mrb[0].mxu0
      %427 = vdwg.mxu0
      %v428 = vmul.f32 %v423, 0.35355338
      %v429 = vpack.c.bf16 %v428, %v428
      %vm430 = vcmask 60416
      %431 = vst.msk [vmem:[%s336] sm:$0xf] %vm430, %v429
      %v432 = vpack.c.bf16 %v423, %v423
      %v434 = vunpack.c.l.b16 %v432
      %v435 = vpack.c.b16 %v434, %v434
      %436 = vrot.lane.b32.xlu0 %v435, 120
      %v437 = vpop.permute.xlu0 %436
      %439 = vst.msk [vmem:[%s347] sm:$0xf] %vm430, %v437
      %440 = vrot.lane.b32.xlu0 %v435, 112
      %v441 = vpop.permute.xlu0 %440
      %443 = vst.msk [vmem:[%s358] sm:$0xf] %vm430, %v441
      %p444 = scmp.lt.s32.totalorder %s22, 1
      %s445 = scalar_select %p444, %s22, 1
      %p446 = scmp.lt.s32.totalorder %s24, 3
      %s447 = scalar_select %p446, %s24, 3
      %p448 = scmp.lt.s32.totalorder %s23, 0
      %s449 = scalar_select %p448, %s23, 0
      %s450 = sadd.s32 %s449, %s447
      %s451 = smul.addr %s445, 4
      %s452 = sadd.s32 %s450, %s451
      %s453 = smul.addr %s452, 4
      %s454 = scalar_lea.vmem %s3, %s453
      %p455 = scmp.lt.s32.totalorder %s22, 1
      %s456 = scalar_select %p455, %s22, 1
      %p457 = scmp.lt.s32.totalorder %s24, 3
      %s458 = scalar_select %p457, %s24, 3
      %p459 = scmp.lt.s32.totalorder %s23, 0
      %s460 = scalar_select %p459, %s23, 0
      %s461 = sadd.s32 %s460, %s458
      %s462 = smul.addr %s456, 4
      %s463 = sadd.s32 %s461, %s462
      %s464 = smul.addr %s463, 4
      %s465 = scalar_lea.vmem %s4, %s464
      %p466 = scmp.lt.s32.totalorder %s22, 1
      %s467 = scalar_select %p466, %s22, 1
      %p468 = scmp.lt.s32.totalorder %s24, 3
      %s469 = scalar_select %p468, %s24, 3
      %p470 = scmp.lt.s32.totalorder %s23, 0
      %s471 = scalar_select %p470, %s23, 0
      %s472 = sadd.s32 %s471, %s469
      %s473 = smul.addr %s467, 4
      %s474 = sadd.s32 %s472, %s473
      %s475 = smul.addr %s474, 4
      %s476 = scalar_lea.vmem %s5, %s475
      // Predicated region
      $region33: #{multi_head_attention.3} parent=31 // pred_check
        %p477 = pneg %p138
      $region34: #{multi_head_attention.3} parent=31 // pred_check_branch
        %479 = sbr.rel (%p477) target = $region36
      $region35: #{multi_head_attention.3} parent=31 // pred_region
        _
      $region36: #{multi_head_attention.3} parent=31 // pred_fallthru
        _
      // Predicated region
      $region37: #{multi_head_attention.3} parent=31 // pred_check
        %p480 = pneg %p168
      $region38: #{multi_head_attention.3} parent=31 // pred_check_branch
        %482 = sbr.rel (%p480) target = $region40
      $region39: #{multi_head_attention.3} parent=31 // pred_region
        _
      $region40: #{multi_head_attention.3} parent=31 // pred_fallthru
        _
      // Predicated region
      $region41: #{multi_head_attention.3} parent=31 // pred_check
        %p483 = pneg %p198
      $region42: #{multi_head_attention.3} parent=31 // pred_check_branch
        %485 = sbr.rel (%p483) target = $region44
      $region43: #{multi_head_attention.3} parent=31 // pred_region
        _
      $region44: #{multi_head_attention.3} parent=31 // pred_fallthru
        _
    $region32: #{multi_head_attention.3} parent=5 // pred_fallthru
      _
    %p486 = scmp.le.s32.totalorder 2, %s12
    // Predicated region
    $region45: #{multi_head_attention.3} parent=5 // pred_check
      %p487 = pneg %p486
    $region46: #{multi_head_attention.3} parent=5 // pred_check_branch
      %489 = sbr.rel (%p487) target = $region48
    $region47: #{multi_head_attention.3} parent=5 // pred_region
      %s490 = ssub.s32 %s12, 2
      // Predicated region
      $region49: #{multi_head_attention.3} parent=47 // pred_check
        %p491 = pneg %p144
      $region50: #{multi_head_attention.3} parent=47 // pred_check_branch
        %493 = sbr.rel (%p491) target = $region52
      $region51: #{multi_head_attention.3} parent=47 // pred_region
        %p494 = scmp.lt.s32.totalorder %s25, 1
        %s495 = scalar_select %p494, %s25, 1
        %p496 = scmp.lt.s32.totalorder %s27, 3
        %s497 = scalar_select %p496, %s27, 3
        %p498 = scmp.lt.s32.totalorder %s26, 0
        %s499 = scalar_select %p498, %s26, 0
        %s500 = sadd.s32 %s499, %s497
        %s501 = smul.addr %s495, 4
        %s502 = sadd.s32 %s500, %s501
        %s503 = smul.addr %s502, 4
        %s504 = scalar_lea.vmem %s3, %s503
      $region52: #{multi_head_attention.3} parent=47 // pred_fallthru
        _
      // Predicated region
      $region53: #{multi_head_attention.3} parent=47 // pred_check
        %p505 = pneg %p174
      $region54: #{multi_head_attention.3} parent=47 // pred_check_branch
        %507 = sbr.rel (%p505) target = $region56
      $region55: #{multi_head_attention.3} parent=47 // pred_region
        %p508 = scmp.lt.s32.totalorder %s25, 1
        %s509 = scalar_select %p508, %s25, 1
        %p510 = scmp.lt.s32.totalorder %s27, 3
        %s511 = scalar_select %p510, %s27, 3
        %p512 = scmp.lt.s32.totalorder %s26, 0
        %s513 = scalar_select %p512, %s26, 0
        %s514 = sadd.s32 %s513, %s511
        %s515 = smul.addr %s509, 4
        %s516 = sadd.s32 %s514, %s515
        %s517 = smul.addr %s516, 4
        %s518 = scalar_lea.vmem %s4, %s517
      $region56: #{multi_head_attention.3} parent=47 // pred_fallthru
        _
      // Predicated region
      $region57: #{multi_head_attention.3} parent=47 // pred_check
        %p519 = pneg %p204
      $region58: #{multi_head_attention.3} parent=47 // pred_check_branch
        %521 = sbr.rel (%p519) target = $region60
      $region59: #{multi_head_attention.3} parent=47 // pred_region
        %p522 = scmp.lt.s32.totalorder %s25, 1
        %s523 = scalar_select %p522, %s25, 1
        %p524 = scmp.lt.s32.totalorder %s27, 3
        %s525 = scalar_select %p524, %s27, 3
        %p526 = scmp.lt.s32.totalorder %s26, 0
        %s527 = scalar_select %p526, %s26, 0
        %s528 = sadd.s32 %s527, %s525
        %s529 = smul.addr %s523, 4
        %s530 = sadd.s32 %s528, %s529
        %s531 = smul.addr %s530, 4
        %s532 = scalar_lea.vmem %s5, %s531
      $region60: #{multi_head_attention.3} parent=47 // pred_fallthru
        _
    $region48: #{multi_head_attention.3} parent=5 // pred_fallthru
      _
  $region6: #{multi_head_attention.3} parent=0 // loop_footer
    %s16 = sadd.s32 1, %s12
  $region7: #{multi_head_attention.3} parent=0 // loop_footer_branch
    %11 = sbr.rel target = $region3
  $region8: #{multi_head_attention.3} parent=0 // loop_exit
    _

// kernel: multi_head_attention.4
$region0: #{multi_head_attention.4}
  #allocation0 [shape = 'u32[]', space=smem, size = 0x4, offset = 0x4, fixed_abs, tag = 'smem constant byte address 0x4 - core index']
  #allocation1 [shape = 'u32[144,128]{1,0:T(1,128)}', space=vmem, size = 0x12000, scoped, tag = 'internal scratch']
  #allocation2 [shape = 'f32[8,1]{1,0:T(8,128)}', space=vmem, size = 0x1000, scoped, tag = 'scratch operand']
  #allocation3 [shape = 'f32[8,1]{1,0:T(8,128)}', space=vmem, size = 0x1000, scoped, tag = 'scratch operand']
  #allocation4 [shape = 'f32[8,8]{1,0:T(8,128)}', space=vmem, size = 0x1000, scoped, tag = 'scratch operand']
  %s0 = inlined_call_operand.vmem [shape: bf16[2,4,8,8], index: 0, kind: input, shape index: {}]
  %s1 = inlined_call_operand.vmem [shape: bf16[2,4,8,8], index: 1, kind: input, shape index: {}]
  %s2 = inlined_call_operand.vmem [shape: bf16[2,4,8,8], index: 2, kind: input, shape index: {}]
  %s3 = inlined_call_operand.vmem [shape: bf16[2,4,8,8], index: 3, kind: output, shape index: {}]
  %s4 = sld [smem:[#allocation0]]
  $region53: #{multi_head_attention.4} parent=0
    _
  %s6 = ssub.s32 1, %s4
  %s7 = scalar_select 0, %s6, %s4
  loop: start=0, step=1, limit=10
  $region2: #{multi_head_attention.4} parent=0 // loop_pre_header
    _
  $region3: #{multi_head_attention.4} parent=0 // loop_header
    %s9 = sphi 0, %s13
    %p10 = scmp.ge.s32.totalorder %s9, 10
    %s16 = sphi 0, %s42
    %s17 = sphi 0, %s38
    %s18 = sphi 0, %s34
    %s19 = sphi 0, %s30
    %s20 = sphi 0, %s16
    %s21 = sphi 0, %s17
    %s22 = sphi 0, %s18
    %s23 = sphi 0, %s19
    %s24 = sphi 0, %s20
    %s25 = sphi 0, %s21
    %s26 = sphi 0, %s22
    %s27 = sphi 0, %s23
    %s49 = sphi 0, %s51
    %s52 = sphi 0, %s49
    %s53 = sphi 0, %s52
    %s69 = sphi 0, %s53
    %s79 = sphi 0, %s81
    %s82 = sphi 0, %s79
    %s83 = sphi 0, %s82
    %s99 = sphi 0, %s83
    %s109 = sphi 0, %s111
    %s112 = sphi 0, %s109
    %s113 = sphi 0, %s112
    %s129 = sphi 0, %s113
    %s139 = sphi 0, %s141
    %s142 = sphi 0, %s139
    %s143 = sphi 0, %s142
    %s159 = sphi 0, %s143
  $region4: #{multi_head_attention.4} parent=0 // loop_header_branch
    %12 = sbr.rel (%p10) target = $region8
  $region5: #{multi_head_attention.4} parent=0 // loop_body
    %s14 = ssub.s32 %s9, 1
    %s15 = ssub.s32 %s9, 2
    %s28 = sadd.s32 1, %s19
    %p29 = scmp.ge.s32.totalorder %s28, 1
    %s30 = scalar_select %p29, 0, %s28
    %s31 = sadd.s32 1, %s18
    %s32 = scalar_select %p29, %s31, %s18
    %p33 = scmp.ge.s32.totalorder %s32, 1
    %s34 = scalar_select %p33, 0, %s32
    %s35 = sadd.s32 1, %s17
    %s36 = scalar_select %p33, %s35, %s17
    %p37 = scmp.ge.s32.totalorder %s36, 4
    %s38 = scalar_select %p37, 0, %s36
    %s39 = sadd.s32 1, %s16
    %s40 = scalar_select %p37, %s39, %s16
    %p41 = scmp.ge.s32.totalorder %s40, 2
    %s42 = scalar_select %p41, 0, %s40
    %s43 = ssub.s32 %s16, %s42
    %s44 = ssub.s32 %s17, %s38
    %s45 = sor.u32 %s43, %s44
    %s46 = ssub.s32 %s18, %s34
    %s47 = sor.u32 %s45, %s46
    %p48 = scmp.eq.s32.totalorder %s47, 0
    %s50 = sadd.s32 %s49, 1
    %s51 = scalar_select %p48, %s49, %s50
    %p54 = pneg %p48
    %p55 = scmp.eq.s32.totalorder %s9, 7
    %p56 = por %p54, %p55
    %p57 = scmp.ne.s32.totalorder %s49, %s52
    %p58 = scmp.eq.s32.totalorder %s9, 0
    %p59 = por %p57, %p58
    %p60 = scmp.ne.s32.totalorder %s49, %s52
    %p61 = scmp.eq.s32.totalorder %s14, 7
    %p62 = por %p60, %p61
    %p63 = scmp.ne.s32.totalorder %s52, %s53
    %p64 = scmp.eq.s32.totalorder %s14, 0
    %p65 = por %p63, %p64
    %p66 = scmp.ne.s32.totalorder %s52, %s53
    %p67 = scmp.eq.s32.totalorder %s15, 7
    %p68 = por %p66, %p67
    %p70 = scmp.ne.s32.totalorder %s53, %s69
    %p71 = scmp.eq.s32.totalorder %s15, 0
    %p72 = por %p70, %p71
    %s73 = ssub.s32 %s16, %s42
    %s74 = ssub.s32 %s17, %s38
    %s75 = sor.u32 %s73, %s74
    %s76 = ssub.s32 %s19, %s30
    %s77 = sor.u32 %s75, %s76
    %p78 = scmp.eq.s32.totalorder %s77, 0
    %s80 = sadd.s32 %s79, 1
    %s81 = scalar_select %p78, %s79, %s80
    %p84 = pneg %p78
    %p85 = scmp.eq.s32.totalorder %s9, 7
    %p86 = por %p84, %p85
    %p87 = scmp.ne.s32.totalorder %s79, %s82
    %p88 = scmp.eq.s32.totalorder %s9, 0
    %p89 = por %p87, %p88
    %p90 = scmp.ne.s32.totalorder %s79, %s82
    %p91 = scmp.eq.s32.totalorder %s14, 7
    %p92 = por %p90, %p91
    %p93 = scmp.ne.s32.totalorder %s82, %s83
    %p94 = scmp.eq.s32.totalorder %s14, 0
    %p95 = por %p93, %p94
    %p96 = scmp.ne.s32.totalorder %s82, %s83
    %p97 = scmp.eq.s32.totalorder %s15, 7
    %p98 = por %p96, %p97
    %p100 = scmp.ne.s32.totalorder %s83, %s99
    %p101 = scmp.eq.s32.totalorder %s15, 0
    %p102 = por %p100, %p101
    %s103 = ssub.s32 %s16, %s42
    %s104 = ssub.s32 %s17, %s38
    %s105 = sor.u32 %s103, %s104
    %s106 = ssub.s32 %s19, %s30
    %s107 = sor.u32 %s105, %s106
    %p108 = scmp.eq.s32.totalorder %s107, 0
    %s110 = sadd.s32 %s109, 1
    %s111 = scalar_select %p108, %s109, %s110
    %p114 = pneg %p108
    %p115 = scmp.eq.s32.totalorder %s9, 7
    %p116 = por %p114, %p115
    %p117 = scmp.ne.s32.totalorder %s109, %s112
    %p118 = scmp.eq.s32.totalorder %s9, 0
    %p119 = por %p117, %p118
    %p120 = scmp.ne.s32.totalorder %s109, %s112
    %p121 = scmp.eq.s32.totalorder %s14, 7
    %p122 = por %p120, %p121
    %p123 = scmp.ne.s32.totalorder %s112, %s113
    %p124 = scmp.eq.s32.totalorder %s14, 0
    %p125 = por %p123, %p124
    %p126 = scmp.ne.s32.totalorder %s112, %s113
    %p127 = scmp.eq.s32.totalorder %s15, 7
    %p128 = por %p126, %p127
    %p130 = scmp.ne.s32.totalorder %s113, %s129
    %p131 = scmp.eq.s32.totalorder %s15, 0
    %p132 = por %p130, %p131
    %s133 = ssub.s32 %s16, %s42
    %s134 = ssub.s32 %s17, %s38
    %s135 = sor.u32 %s133, %s134
    %s136 = ssub.s32 %s18, %s34
    %s137 = sor.u32 %s135, %s136
    %p138 = scmp.eq.s32.totalorder %s137, 0
    %s140 = sadd.s32 %s139, 1
    %s141 = scalar_select %p138, %s139, %s140
    %p144 = pneg %p138
    %p145 = scmp.eq.s32.totalorder %s9, 7
    %p146 = por %p144, %p145
    %p147 = scmp.ne.s32.totalorder %s139, %s142
    %p148 = scmp.eq.s32.totalorder %s9, 0
    %p149 = por %p147, %p148
    %p150 = scmp.ne.s32.totalorder %s139, %s142
    %p151 = scmp.eq.s32.totalorder %s14, 7
    %p152 = por %p150, %p151
    %p153 = scmp.ne.s32.totalorder %s142, %s143
    %p154 = scmp.eq.s32.totalorder %s14, 0
    %p155 = por %p153, %p154
    %p156 = scmp.ne.s32.totalorder %s142, %s143
    %p157 = scmp.eq.s32.totalorder %s15, 7
    %p158 = por %p156, %p157
    %p160 = scmp.ne.s32.totalorder %s143, %s159
    %p161 = scmp.eq.s32.totalorder %s15, 0
    %p162 = por %p160, %p161
    %p163 = scmp.le.s32.totalorder 1, %s9
    %p164 = scmp.lt.s32.totalorder %s9, 9
    %p165 = pnand %p163, %p164
    %p166 = pneg %p165
    // Predicated region
    $region9: #{multi_head_attention.4} parent=5 // pred_check
      _
    $region10: #{multi_head_attention.4} parent=5 // pred_check_branch
      %168 = sbr.rel (%p165) target = $region12
    $region11: #{multi_head_attention.4} parent=5 // pred_region
      %s169 = ssub.s32 %s9, 1
    $region12: #{multi_head_attention.4} parent=5 // pred_fallthru
      _
    %p170 = scmp.lt.s32.totalorder %s9, 8
    // Predicated region
    $region13: #{multi_head_attention.4} parent=5 // pred_check
      %p171 = pneg %p170
    $region14: #{multi_head_attention.4} parent=5 // pred_check_branch
      %173 = sbr.rel (%p171) target = $region16
    $region15: #{multi_head_attention.4} parent=5 // pred_region
      // Predicated region
      $region17: #{multi_head_attention.4} parent=15 // pred_check
        %p174 = pneg %p59
      $region18: #{multi_head_attention.4} parent=15 // pred_check_branch
        %176 = sbr.rel (%p174) target = $region20
      $region19: #{multi_head_attention.4} parent=15 // pred_region
        %p177 = scmp.lt.s32.totalorder %s16, 1
        %s178 = scalar_select %p177, %s16, 1
        %p179 = scmp.lt.s32.totalorder %s17, 3
        %s180 = scalar_select %p179, %s17, 3
        %p181 = scmp.lt.s32.totalorder %s18, 0
        %s182 = scalar_select %p181, %s18, 0
        %s183 = sadd.s32 %s182, %s180
        %s184 = smul.addr %s178, 4
        %s185 = sadd.s32 %s183, %s184
        %s186 = smul.addr %s185, 4
        %s187 = scalar_lea.vmem %s0, %s186
      $region20: #{multi_head_attention.4} parent=15 // pred_fallthru
        _
      // Predicated region
      $region21: #{multi_head_attention.4} parent=15 // pred_check
        %p188 = pneg %p89
      $region22: #{multi_head_attention.4} parent=15 // pred_check_branch
        %190 = sbr.rel (%p188) target = $region24
      $region23: #{multi_head_attention.4} parent=15 // pred_region
        %p191 = scmp.lt.s32.totalorder %s16, 1
        %s192 = scalar_select %p191, %s16, 1
        %p193 = scmp.lt.s32.totalorder %s17, 3
        %s194 = scalar_select %p193, %s17, 3
        %p195 = scmp.lt.s32.totalorder %s19, 0
        %s196 = scalar_select %p195, %s19, 0
        %s197 = sadd.s32 %s196, %s194
        %s198 = smul.addr %s192, 4
        %s199 = sadd.s32 %s197, %s198
        %s200 = smul.addr %s199, 4
        %s201 = scalar_lea.vmem %s1, %s200
      $region24: #{multi_head_attention.4} parent=15 // pred_fallthru
        _
      // Predicated region
      $region25: #{multi_head_attention.4} parent=15 // pred_check
        %p202 = pneg %p119
      $region26: #{multi_head_attention.4} parent=15 // pred_check_branch
        %204 = sbr.rel (%p202) target = $region28
      $region27: #{multi_head_attention.4} parent=15 // pred_region
        %p205 = scmp.lt.s32.totalorder %s16, 1
        %s206 = scalar_select %p205, %s16, 1
        %p207 = scmp.lt.s32.totalorder %s17, 3
        %s208 = scalar_select %p207, %s17, 3
        %p209 = scmp.lt.s32.totalorder %s19, 0
        %s210 = scalar_select %p209, %s19, 0
        %s211 = sadd.s32 %s210, %s208
        %s212 = smul.addr %s206, 4
        %s213 = sadd.s32 %s211, %s212
        %s214 = smul.addr %s213, 4
        %s215 = scalar_lea.vmem %s2, %s214
      $region28: #{multi_head_attention.4} parent=15 // pred_fallthru
        _
    $region16: #{multi_head_attention.4} parent=5 // pred_fallthru
      _
    %p216 = scmp.le.s32.totalorder 1, %s9
    %p217 = scmp.lt.s32.totalorder %s9, 9
    %p218 = pnand %p216, %p217
    %p219 = pneg %p218
    // Predicated region
    $region29: #{multi_head_attention.4} parent=5 // pred_check
      _
    $region30: #{multi_head_attention.4} parent=5 // pred_check_branch
      %221 = sbr.rel (%p218) target = $region32
    $region31: #{multi_head_attention.4} parent=5 // pred_region
      %s222 = ssub.s32 %s9, 1
      %p223 = scmp.lt.s32.totalorder %s20, 1
      %s224 = scalar_select %p223, %s20, 1
      %p225 = scmp.lt.s32.totalorder %s21, 3
      %s226 = scalar_select %p225, %s21, 3
      %p227 = scmp.lt.s32.totalorder %s22, 0
      %s228 = scalar_select %p227, %s22, 0
      %s229 = sadd.s32 %s228, %s226
      %s230 = smul.addr %s224, 4
      %s231 = sadd.s32 %s229, %s230
      %s232 = smul.addr %s231, 4
      %s233 = scalar_lea.vmem %s0, %s232
      %p234 = pneg %p65
      %p235 = pneg %p62
      %p236 = scmp.lt.s32.totalorder %s20, 1
      %s237 = scalar_select %p236, %s20, 1
      %p238 = scmp.lt.s32.totalorder %s21, 3
      %s239 = scalar_select %p238, %s21, 3
      %p240 = scmp.lt.s32.totalorder %s23, 0
      %s241 = scalar_select %p240, %s23, 0
      %s242 = sadd.s32 %s241, %s239
      %s243 = smul.addr %s237, 4
      %s244 = sadd.s32 %s242, %s243
      %s245 = smul.addr %s244, 4
      %s246 = scalar_lea.vmem %s1, %s245
      %p247 = pneg %p95
      %p248 = pneg %p92
      %p249 = scmp.lt.s32.totalorder %s20, 1
      %s250 = scalar_select %p249, %s20, 1
      %p251 = scmp.lt.s32.totalorder %s21, 3
      %s252 = scalar_select %p251, %s21, 3
      %p253 = scmp.lt.s32.totalorder %s23, 0
      %s254 = scalar_select %p253, %s23, 0
      %s255 = sadd.s32 %s254, %s252
      %s256 = smul.addr %s250, 4
      %s257 = sadd.s32 %s255, %s256
      %s258 = smul.addr %s257, 4
      %s259 = scalar_lea.vmem %s2, %s258
      %p260 = pneg %p125
      %p261 = pneg %p122
      %p262 = pneg %p155
      %p263 = pneg %p152
      %p264 = scmp.lt.s32.totalorder %s20, 1
      %s265 = scalar_select %p264, %s20, 1
      %p266 = scmp.lt.s32.totalorder %s21, 3
      %s267 = scalar_select %p266, %s21, 3
      %p268 = scmp.lt.s32.totalorder %s22, 0
      %s269 = scalar_select %p268, %s22, 0
      %s270 = sadd.s32 %s269, %s267
      %s271 = smul.addr %s265, 4
      %s272 = sadd.s32 %s270, %s271
      %s273 = smul.addr %s272, 4
      %s274 = scalar_lea.vmem %s3, %s273
      %p275 = scmp.lt.s32.totalorder %s20, 1
      %s276 = scalar_select %p275, %s20, 1
      %p277 = scmp.lt.s32.totalorder %s21, 3
      %s278 = scalar_select %p277, %s21, 3
      %p279 = scmp.lt.s32.totalorder %s22, 0
      %s280 = scalar_select %p279, %s22, 0
      %s281 = sadd.s32 %s280, %s278
      %s282 = smul.addr %s276, 4
      %s283 = sadd.s32 %s281, %s282
      %s284 = smul.addr %s283, 4
      %s285 = scalar_lea.vmem %s0, %s284
      %p286 = scmp.lt.s32.totalorder %s20, 1
      %s287 = scalar_select %p286, %s20, 1
      %p288 = scmp.lt.s32.totalorder %s21, 3
      %s289 = scalar_select %p288, %s21, 3
      %p290 = scmp.lt.s32.totalorder %s23, 0
      %s291 = scalar_select %p290, %s23, 0
      %s292 = sadd.s32 %s291, %s289
      %s293 = smul.addr %s287, 4
      %s294 = sadd.s32 %s292, %s293
      %s295 = smul.addr %s294, 4
      %s296 = scalar_lea.vmem %s1, %s295
      %p297 = scmp.lt.s32.totalorder %s20, 1
      %s298 = scalar_select %p297, %s20, 1
      %p299 = scmp.lt.s32.totalorder %s21, 3
      %s300 = scalar_select %p299, %s21, 3
      %p301 = scmp.lt.s32.totalorder %s23, 0
      %s302 = scalar_select %p301, %s23, 0
      %s303 = sadd.s32 %s302, %s300
      %s304 = smul.addr %s298, 4
      %s305 = sadd.s32 %s303, %s304
      %s306 = smul.addr %s305, 4
      %s307 = scalar_lea.vmem %s2, %s306
      %p308 = scmp.lt.s32.totalorder %s20, 1
      %s309 = scalar_select %p308, %s20, 1
      %p310 = scmp.lt.s32.totalorder %s21, 3
      %s311 = scalar_select %p310, %s21, 3
      %p312 = scmp.lt.s32.totalorder %s22, 0
      %s313 = scalar_select %p312, %s22, 0
      %s314 = sadd.s32 %s313, %s311
      %s315 = smul.addr %s309, 4
      %s316 = sadd.s32 %s314, %s315
      %s317 = smul.addr %s316, 4
      %s318 = scalar_lea.vmem %s3, %s317
      %p320 = scmp.eq.s32.totalorder %s23, 0
      // Predicated region
      $region33: #{multi_head_attention.4} parent=31 // pred_check
        %p321 = pneg %p320
      $region34: #{multi_head_attention.4} parent=31 // pred_check_branch
        %323 = sbr.rel (%p321) target = $region36
      $region35: #{multi_head_attention.4} parent=31 // pred_region
        %vm324 = vcmask 7168
        %325 = vst.msk [vmem:[#allocation2] sm:$0xff] %vm324, -inf
        %326 = vst.msk [vmem:[#allocation3] sm:$0xff] %vm324, 0.0
        %vm327 = vcmask 64512
        %328 = vst.msk [vmem:[#allocation4] sm:$0xff] %vm327, 0.0
      $region36: #{multi_head_attention.4} parent=31 // pred_fallthru
        _
      %v329 = vld [vmem:[%s285] sm:$0xf]
      %v330 = vld [vmem:[%s296] sm:$0xf]
      %v331 = vld [vmem:[%s307] sm:$0xf]
      %vm332 = vcmask 64512
      %v334 = vsel %vm332, %v329, 0
      %v337 = vsel %vm332, %v330, 0
      %339 = vmatprep.subr.bf16.mxu0 0
      %340 = vmatpush1.bf16.xpose.msra.mxu0 %v337
      %341 = vmatprep.subr.bf16.mxu0 0
      %342 = vmatpush1.bf16.xpose.msra.mxu0 0
      %343 = vmatprep.subr.bf16.mxu0 0
      %344 = vmatpush1.bf16.xpose.msra.mxu0 0
      %345 = vmatprep.subr.bf16.mxu0 0
      %346 = vmatpush1.bf16.xpose.msra.mxu0 0
      %347 = vmatprep.subr.bf16.mxu0 0
      %348 = vmatpush1.bf16.xpose.msra.mxu0 0
      %349 = vmatprep.subr.bf16.mxu0 0
      %350 = vmatpush1.bf16.xpose.msra.mxu0 0
      %351 = vmatprep.subr.bf16.mxu0 0
      %352 = vmatpush1.bf16.xpose.msra.mxu0 0
      %353 = vmatprep.subr.bf16.mxu0 0
      %354 = vmatpush1.bf16.xpose.msra.mxu0 0
      %355 = vmatprep.subr.bf16.mxu0 0
      %356 = vmatpush1.bf16.xpose.msra.mxu0 0
      %357 = vmatprep.subr.bf16.mxu0 0
      %358 = vmatpush1.bf16.xpose.msra.mxu0 0
      %359 = vmatprep.subr.bf16.mxu0 0
      %360 = vmatpush1.bf16.xpose.msra.mxu0 0
      %361 = vmatprep.subr.bf16.mxu0 0
      %362 = vmatpush1.bf16.xpose.msra.mxu0 0
      %363 = vmatprep.subr.bf16.mxu0 0
      %364 = vmatpush1.bf16.xpose.msra.mxu0 0
      %365 = vmatprep.subr.bf16.mxu0 0
      %366 = vmatpush1.bf16.xpose.msra.mxu0 0
      %367 = vmatprep.subr.bf16.mxu0 0
      %368 = vmatpush1.bf16.xpose.msra.mxu0 0
      %369 = vmatprep.subr.bf16.mxu0 0
      %370 = vmatpush1.bf16.xpose.msra.mxu0 0
      %371 = vmatprep.mubr.bf16.mxu0 0
      %372 = vmatmul.mubr.bf16.gmra.mrb[0].mxu0 %v334
      %v373 = vpop.f32.mrb[0].mxu0
      %v374 = vadd.f32 0.0, %v373
      %v375 = vpop.f32.mrb[0].mxu0
      %v376 = vpop.f32.mrb[0].mxu0
      %v377 = vpop.f32.mrb[0].mxu0
      %378 = vdwg.mxu0
      %v379 = vld [vmem:[#allocation2] sm:$0xff]
      %v380 = vsel %vm332, %v374, -inf
      %381 = vmax.xlane.f32.xlu0 %v380
      %v382 = vpop.xlane.xlu0 %381
      %v383 = vmax.f32 %v379, %v382
      %v384 = vsub.f32 %v379, %v383
      %v385 = vmul.f32 %v384, 1.442695
      %v386 = vpow.pop %v385
      %388 = vset.pattern.permute.xlu0 0
      %389 = vperm.xlu0 %388, %v383
      %v390 = vpop.permute.xlu0 %389
      %v392 = vsub.f32 %v374, %v390
      %v393 = vmul.f32 %v392, 1.442695
      %v394 = vpow.pop %v393
      %v395 = vld [vmem:[#allocation3] sm:$0xff]
      %v396 = vmul.f32 %v386, %v395
      %v397 = vsel %vm332, %v394, 0.0
      %398 = vadd.xlane.f32.xlu0 %v397
      %v399 = vpop.xlane.xlu0 %398
      %v400 = vadd.f32 %v396, %v399
      %vm401 = vcmask 7168
      %402 = vst.msk [vmem:[#allocation3] sm:$0xff] %vm401, %v400
      %v403 = vld [vmem:[#allocation4] sm:$0xff]
      %405 = vset.pattern.permute.xlu0 0
      %406 = vperm.xlu0 %405, %v386
      %v407 = vpop.permute.xlu0 %406
      %v409 = vmul.f32 %v407, %v403
      %v410 = vpack.c.bf16 %v394, %v394
      %v412 = vsel %vm332, %v410, 0
      %vm414 = vcmask 1043456
      %v416 = vsel %vm414, %v331, 0
      %418 = vmatprep.subr.bf16.mxu0 0
      %419 = vmatpush1.bf16.msra.mxu0 %v416
      %420 = vmatprep.subr.bf16.mxu0 0
      %421 = vmatpush1.bf16.msra.mxu0 0
      %422 = vmatprep.subr.bf16.mxu0 0
      %423 = vmatpush1.bf16.msra.mxu0 0
      %424 = vmatprep.subr.bf16.mxu0 0
      %425 = vmatpush1.bf16.msra.mxu0 0
      %426 = vmatprep.subr.bf16.mxu0 0
      %427 = vmatpush1.bf16.msra.mxu0 0
      %428 = vmatprep.subr.bf16.mxu0 0
      %429 = vmatpush1.bf16.msra.mxu0 0
      %430 = vmatprep.subr.bf16.mxu0 0
      %431 = vmatpush1.bf16.msra.mxu0 0
      %432 = vmatprep.subr.bf16.mxu0 0
      %433 = vmatpush1.bf16.msra.mxu0 0
      %434 = vmatprep.subr.bf16.mxu0 0
      %435 = vmatpush1.bf16.msra.mxu0 0
      %436 = vmatprep.subr.bf16.mxu0 0
      %437 = vmatpush1.bf16.msra.mxu0 0
      %438 = vmatprep.subr.bf16.mxu0 0
      %439 = vmatpush1.bf16.msra.mxu0 0
      %440 = vmatprep.subr.bf16.mxu0 0
      %441 = vmatpush1.bf16.msra.mxu0 0
      %442 = vmatprep.subr.bf16.mxu0 0
      %443 = vmatpush1.bf16.msra.mxu0 0
      %444 = vmatprep.subr.bf16.mxu0 0
      %445 = vmatpush1.bf16.msra.mxu0 0
      %446 = vmatprep.subr.bf16.mxu0 0
      %447 = vmatpush1.bf16.msra.mxu0 0
      %448 = vmatprep.subr.bf16.mxu0 0
      %449 = vmatpush1.bf16.msra.mxu0 0
      %450 = vmatprep.mubr.bf16.mxu0 0
      %451 = vmatmul.mubr.bf16.gmra.mrb[0].mxu0 %v412
      %v452 = vpop.f32.mrb[0].mxu0
      %v453 = vadd.f32 0.0, %v452
      %v454 = vpop.f32.mrb[0].mxu0
      %v455 = vpop.f32.mrb[0].mxu0
      %v456 = vpop.f32.mrb[0].mxu0
      %457 = vdwg.mxu0
      %v458 = vadd.f32 %v409, %v453
      %459 = vst.msk [vmem:[#allocation4] sm:$0xff] %vm332, %v458
      %460 = vst.msk [vmem:[#allocation2] sm:$0xff] %vm401, %v383
      // Predicated region
      $region37: #{multi_head_attention.4} parent=31 // pred_check
        %p461 = pneg %p320
      $region38: #{multi_head_attention.4} parent=31 // pred_check_branch
        %463 = sbr.rel (%p461) target = $region40
      $region39: #{multi_head_attention.4} parent=31 // pred_region
        %v464 = vld [vmem:[#allocation3] sm:$0xff]
        %v465 = vrcp.pop %v464
        %v466 = vld [vmem:[#allocation4] sm:$0xff]
        %468 = vset.pattern.permute.xlu0 0
        %469 = vperm.xlu0 %468, %v465
        %v470 = vpop.permute.xlu0 %469
        %v472 = vmul.f32 %v466, %v470
        %v473 = vpack.c.bf16 %v472, %v472
        %vm474 = vcmask 60416
        %475 = vst.msk [vmem:[%s318] sm:$0xf] %vm474, %v473
      $region40: #{multi_head_attention.4} parent=31 // pred_fallthru
        _
      %p476 = scmp.lt.s32.totalorder %s20, 1
      %s477 = scalar_select %p476, %s20, 1
      %p478 = scmp.lt.s32.totalorder %s21, 3
      %s479 = scalar_select %p478, %s21, 3
      %p480 = scmp.lt.s32.totalorder %s22, 0
      %s481 = scalar_select %p480, %s22, 0
      %s482 = sadd.s32 %s481, %s479
      %s483 = smul.addr %s477, 4
      %s484 = sadd.s32 %s482, %s483
      %s485 = smul.addr %s484, 4
      %s486 = scalar_lea.vmem %s3, %s485
      // Predicated region
      $region41: #{multi_head_attention.4} parent=31 // pred_check
        %p487 = pneg %p152
      $region42: #{multi_head_attention.4} parent=31 // pred_check_branch
        %489 = sbr.rel (%p487) target = $region44
      $region43: #{multi_head_attention.4} parent=31 // pred_region
        _
      $region44: #{multi_head_attention.4} parent=31 // pred_fallthru
        _
    $region32: #{multi_head_attention.4} parent=5 // pred_fallthru
      _
    %p490 = scmp.le.s32.totalorder 2, %s9
    // Predicated region
    $region45: #{multi_head_attention.4} parent=5 // pred_check
      %p491 = pneg %p490
    $region46: #{multi_head_attention.4} parent=5 // pred_check_branch
      %493 = sbr.rel (%p491) target = $region48
    $region47: #{multi_head_attention.4} parent=5 // pred_region
      %s494 = ssub.s32 %s9, 2
      // Predicated region
      $region49: #{multi_head_attention.4} parent=47 // pred_check
        %p495 = pneg %p158
      $region50: #{multi_head_attention.4} parent=47 // pred_check_branch
        %497 = sbr.rel (%p495) target = $region52
      $region51: #{multi_head_attention.4} parent=47 // pred_region
        %p498 = scmp.lt.s32.totalorder %s24, 1
        %s499 = scalar_select %p498, %s24, 1
        %p500 = scmp.lt.s32.totalorder %s25, 3
        %s501 = scalar_select %p500, %s25, 3
        %p502 = scmp.lt.s32.totalorder %s26, 0
        %s503 = scalar_select %p502, %s26, 0
        %s504 = sadd.s32 %s503, %s501
        %s505 = smul.addr %s499, 4
        %s506 = sadd.s32 %s504, %s505
        %s507 = smul.addr %s506, 4
        %s508 = scalar_lea.vmem %s3, %s507
      $region52: #{multi_head_attention.4} parent=47 // pred_fallthru
        _
    $region48: #{multi_head_attention.4} parent=5 // pred_fallthru
      _
  $region6: #{multi_head_attention.4} parent=0 // loop_footer
    %s13 = sadd.s32 1, %s9
  $region7: #{multi_head_attention.4} parent=0 // loop_footer_branch
    %8 = sbr.rel target = $region3
  $region8: #{multi_head_attention.4} parent=0 // loop_exit
    _

</llo_original>
